<compile_context>
chip_gen: v7x
topology: tpu7x:2x2x1
jax: 0.10.0
libtpu: 0.0.40
codegen_flags: <defaults>
</compile_context>

<pallas_src>
import math
import numpy as np
import jax
import jax.numpy as jnp
from jax.experimental import pallas as pl
from jax.experimental.pallas import tpu as pltpu

LATENT_DIM = 4
INPUT_FEATS = 203
EX_FEATS = 100
N_FRAMES = 15          # x frames
N_PAST = 15            # past_motion frames
N_EX = 1               # example_motoin frames
CAT_DIM = N_PAST + N_EX + 1 + N_FRAMES   # 15 + 1 + 1 + 15 = 32
HIDDEN1 = 256
HIDDEN2 = 128
MAX_LEN = 1000


def _leaky_relu(x, alpha=0.2):
    # nn.LeakyReLU(0.2) in the torch module (explicit, not the 0.01 default).
    return jnp.maximum(x, alpha * x)


def _wf_tree_reduce(h2, wf_ref, base, n, bs):
    """sum_s wf[base+s] * h2[s*bs:(s+1)*bs, :] as a pairwise tree (depth ~log2 n).

    Fuses the final_fc slot weighting into the reduce — no weighted copy of h2
    is materialized and there is no 31-deep serial add chain."""
    terms = [h2[s * bs:(s + 1) * bs, :] * wf_ref[base + s] for s in range(n)]
    while len(terms) > 1:
        nxt = [terms[i] + terms[i + 1] for i in range(0, len(terms) - 1, 2)]
        if len(terms) % 2:
            nxt.append(terms[-1])
        terms = nxt
    return terms[0]


def _disc_kernel(wf_ref, xs_ref, c2_ref, w203_ref, wc2_ref, b256_ref,
                 wl2_ref, v128_ref, out_ref):
    """Rows are (slot, batch)-major.
      wf_ref   : SMEM (32,)  f32   final_fc weights per concat slot
      xs_ref   : [2, 15*bs, 203]   bf16  stacked (past_motion rows, x rows)
      w203_ref : [2, 203, 256]     bf16  stacked (fc1@wl1, poseEmbedding@wl1)
      wc2_ref  : [100, 256]        bf16  fc2@wl1
      b256_ref : [3, 256]          f32   fused stream biases (c1, c2, x)
      wl2_ref  : [256, 128]        bf16
      v128_ref : [2, 128]          f32   rows = (bl2, wl3)
    The timestep-embedding slot (16) and all output-bias constants are folded
    into a per-t lookup table added OUTSIDE the kernel."""
    f32, bf16 = jnp.float32, jnp.bfloat16
    bs = out_ref.shape[0]

    bl2 = v128_ref[0:1, :]
    wl3 = v128_ref[1:2, :]
    wl2 = wl2_ref[...]

    # --- stream 0: past_motion, concat slots 0..14 (fc1 folded with wl1) ---
    h1 = _leaky_relu(jnp.dot(xs_ref[0], w203_ref[0],
                             preferred_element_type=f32) + b256_ref[0:1, :])
    h2 = _leaky_relu(jnp.dot(h1.astype(bf16), wl2,
                             preferred_element_type=f32) + bl2)
    acc = _wf_tree_reduce(h2, wf_ref, 0, N_PAST, bs)

    # --- stream 1: example_motoin, concat slot 15 (fc2 folded with wl1) ---
    h1 = _leaky_relu(jnp.dot(c2_ref[...], wc2_ref[...],
                             preferred_element_type=f32) + b256_ref[1:2, :])
    h2 = _leaky_relu(jnp.dot(h1.astype(bf16), wl2,
                             preferred_element_type=f32) + bl2)
    acc = acc + h2 * wf_ref[N_PAST]

    # (concat slot 16 = timestep embedding: pure function of t, precomputed.)

    # --- stream 2: x, concat slots 17..31 (poseEmbedding folded with wl1) ---
    h1 = _leaky_relu(jnp.dot(xs_ref[1], w203_ref[1],
                             preferred_element_type=f32) + b256_ref[2:3, :])
    h2 = _leaky_relu(jnp.dot(h1.astype(bf16), wl2,
                             preferred_element_type=f32) + bl2)
    acc = acc + _wf_tree_reduce(h2, wf_ref, N_PAST + 2, N_FRAMES, bs)

    # final_fc ∘ permute(1,0,2).reshape(-1,32) ∘ wl3, commuted: one lane reduce.
    out_ref[...] = jnp.sum(acc * wl3, axis=1, keepdims=True)


def make_positional_encoding(max_len, d_model):
    position = np.arange(max_len, dtype=np.float32)[:, None]
    div_term = np.exp(np.arange(0, d_model, 2, dtype=np.float32)
                      * (-np.log(10000.0) / d_model))
    pe = np.zeros((max_len, d_model), dtype=np.float32)
    pe[:, 0::2] = np.sin(position * div_term)
    pe[:, 1::2] = np.cos(position * div_term)
    return jnp.asarray(pe)


def make_linear(key, in_dim, out_dim, mode="torch_default", scale=1.0):
    """Returns (W [in, out], b [out]) — W stored transposed vs torch."""
    kw, kb = jax.random.split(key)
    if mode == "dense":   # variance_scaling (fan_avg) + zero bias
        fan = max(1.0, (in_dim + out_dim) / 2.0)
        bound = math.sqrt(3.0 * scale / fan)
        w = jax.random.uniform(kw, (in_dim, out_dim), jnp.float32, -bound, bound)
        b = jnp.zeros((out_dim,), jnp.float32)
    else:                 # nn.Linear default-ish
        bound = 1.0 / math.sqrt(in_dim)
        w = jax.random.uniform(kw, (in_dim, out_dim), jnp.float32, -bound, bound)
        b = jax.random.uniform(kb, (out_dim,), jnp.float32, -bound, bound)
    return w, b


def init_params(key):
    keys = jax.random.split(key, 10)
    p = {}
    p["w_pose"], p["b_pose"] = make_linear(keys[0], INPUT_FEATS, LATENT_DIM)
    p["w_fc1"], p["b_fc1"] = make_linear(keys[1], INPUT_FEATS, LATENT_DIM)
    p["w_fc2"], p["b_fc2"] = make_linear(keys[2], EX_FEATS, LATENT_DIM)
    p["wt1"], p["bt1"] = make_linear(keys[3], LATENT_DIM, LATENT_DIM)
    p["wt2"], p["bt2"] = make_linear(keys[4], LATENT_DIM, LATENT_DIM)
    p["wl1"], p["bl1"] = make_linear(keys[5], LATENT_DIM, HIDDEN1, mode="dense")
    p["wl2"], p["bl2"] = make_linear(keys[6], HIDDEN1, HIDDEN2, mode="dense")
    p["wl3"], p["bl3"] = make_linear(keys[7], HIDDEN2, 1, mode="dense")
    p["wf"], p["bf"] = make_linear(keys[8], CAT_DIM, 1, mode="dense")
    return p


def fuse_params(p, pe_table):
    """One-time host-side weight fusion (runs outside jit, once)."""
    wl1, bl1 = p["wl1"], p["bl1"]
    wl2, bl2 = p["wl2"], p["bl2"]
    wl3 = p["wl3"][:, 0]                                  # [128]
    wf = p["wf"][:, 0]                                    # [32]
    const = p["bl3"][0] * jnp.sum(wf) + p["bf"][0]        # all output-bias terms

    # Timestep branch: depends only on t -> precompute its scalar contribution
    # to the output for every t, in exact f32 (matches the unfused reference).
    h = pe_table @ p["wt1"] + p["bt1"]                    # [L, 4]
    h = h * jax.nn.sigmoid(h)                             # SiLU
    emb = h @ p["wt2"] + p["bt2"]                         # [L, 4]
    h1e = _leaky_relu(emb @ wl1 + bl1)                    # [L, 256]
    h2e = _leaky_relu(h1e @ wl2 + bl2)                    # [L, 128]
    emb_tab = wf[16] * (h2e @ wl3) + const                # [L] (absorbs const)

    return {
        # fused 4->256 projections for (past_motion, x): bf16 MXU operands
        "W203": jnp.stack([p["w_fc1"] @ wl1, p["w_pose"] @ wl1]).astype(jnp.bfloat16),
        # fused 100->256 projection for example_motoin
        "Wc2": (p["w_fc2"] @ wl1).astype(jnp.bfloat16),
        # fused biases for the 3 in-kernel streams (c1, c2, x)
        "b256": jnp.stack([p["b_fc1"] @ wl1 + bl1,
                           p["b_fc2"] @ wl1 + bl1,
                           p["b_pose"] @ wl1 + bl1]),      # [3, 256] f32
        "wl2": wl2.astype(jnp.bfloat16),                   # [256, 128] bf16
        "v128": jnp.stack([bl2, wl3]),                     # [2, 128] f32
        "wf": wf,                                          # [32] f32 -> SMEM
        "emb_tab": emb_tab,                                # [L] f32
    }


@jax.jit
def gan_discriminator_forward(fused, x, t, y):
    """x: [bs, 203, 1, 15] f32, t: [bs] int32,
       y['past_motion']: [bs, 203, 1, 15], y['example_motoin']: [bs, 100, 1]."""
    bs = x.shape[0]
    # Per-slot slices in the kernel are sublane-aligned only when bs % 8 == 0.
    # TODO(synk): pad the batch to a multiple of 8 for arbitrary bs.
    assert bs % 8 == 0, "kernel expects bs to be a multiple of 8"

    # XLA glue matching torch's squeeze/permutes; rows flattened (slot, batch)-major.
    x_rows = jnp.transpose(x[:, :, 0, :], (2, 0, 1)).reshape(N_FRAMES * bs, INPUT_FEATS)
    c1_rows = jnp.transpose(y["past_motion"][:, :, 0, :], (2, 0, 1)
                            ).reshape(N_PAST * bs, INPUT_FEATS)
    c2_rows = jnp.transpose(y["example_motoin"], (2, 0, 1)).reshape(N_EX * bs, EX_FEATS)

    xs203 = jnp.stack([c1_rows, x_rows]).astype(jnp.bfloat16)   # [2, 15*bs, 203]
    c2_bf = c2_rows.astype(jnp.bfloat16)                        # [bs, 100]

    vmem = pl.BlockSpec(memory_space=pltpu.MemorySpace.VMEM)
    smem = pl.BlockSpec(memory_space=pltpu.MemorySpace.SMEM)

    args = (fused["wf"], xs203, c2_bf, fused["W203"], fused["Wc2"],
            fused["b256"], fused["wl2"], fused["v128"])
    in_specs = [smem] + [vmem] * (len(args) - 1)

    flops = 2 * (2 * (N_FRAMES * bs) * INPUT_FEATS * HIDDEN1      # 203->256 x2
                 + bs * EX_FEATS * HIDDEN1                        # 100->256
                 + (2 * N_FRAMES * bs + bs) * HIDDEN1 * HIDDEN2)  # 256->128
    bytes_accessed = sum(int(a.size) * a.dtype.itemsize for a in args) + bs * 4

    out = pl.pallas_call(
        _disc_kernel,
        out_shape=jax.ShapeDtypeStruct((bs, 1), jnp.float32),
        in_specs=in_specs,
        out_specs=vmem,
        cost_estimate=pl.CostEstimate(flops=flops, transcendentals=0,
                                      bytes_accessed=bytes_accessed),
    )(*args)

    # Timestep-embedding slot + all output biases: precomputed per-t lookup.
    return out + fused["emb_tab"][t][:, None]


def reference_forward(p, pe_table, x, t, y):
    """Pure-JAX, unfused f32 replica of the torch forward, for verification."""
    xp = jnp.transpose(x[:, :, 0, :], (2, 0, 1))
    xe = xp @ p["w_pose"] + p["b_pose"]
    c1 = jnp.transpose(y["past_motion"], (3, 2, 0, 1))[:, 0, :, :]
    c1e = c1 @ p["w_fc1"] + p["b_fc1"]
    c2 = jnp.transpose(y["example_motoin"], (2, 0, 1))
    c2e = c2 @ p["w_fc2"] + p["b_fc2"]
    h = pe_table[t] @ p["wt1"] + p["bt1"]
    h = h * jax.nn.sigmoid(h)
    emb = (h @ p["wt2"] + p["bt2"])[None]                        # [1, bs, 4]
    xseq = jnp.concatenate([c1e, c2e, emb, xe], axis=0)          # [32, bs, 4]
    h1 = _leaky_relu(xseq @ p["wl1"] + p["bl1"])
    h2 = _leaky_relu(h1 @ p["wl2"] + p["bl2"])
    o = h2 @ p["wl3"] + p["bl3"]                                 # [32, bs, 1]
    o = jnp.transpose(o, (1, 0, 2)).reshape(-1, CAT_DIM)         # [bs, 32]
    return o @ p["wf"] + p["bf"]                                 # [bs, 1]


if __name__ == "__main__":
    key = jax.random.PRNGKey(0)
    k_param, k_x, k_t, k_c1, k_c2 = jax.random.split(key, 5)

    bs = 8   # bs > 1 so that torch .squeeze() only drops the singleton joint dim
    params = init_params(k_param)
    pe_table = make_positional_encoding(MAX_LEN, LATENT_DIM)
    fused = fuse_params(params, pe_table)

    x = jax.random.normal(k_x, (bs, INPUT_FEATS, 1, N_FRAMES), jnp.float32)
    t = jax.random.randint(k_t, (bs,), 0, MAX_LEN, dtype=jnp.int32)
    y = {
        "past_motion": jax.random.normal(k_c1, (bs, INPUT_FEATS, 1, N_PAST), jnp.float32),
        "example_motoin": jax.random.normal(k_c2, (bs, EX_FEATS, N_EX), jnp.float32),
    }

    out = gan_discriminator_forward(fused, x, t, y)
    out = jax.block_until_ready(out)

    ref = reference_forward(params, pe_table, x, t, y)
    assert out.shape == (bs, 1)
    # bf16 inputs/weights with f32 accumulation on the matmuls; everything else f32.
    assert np.allclose(np.asarray(out), np.asarray(ref), atol=2e-2, rtol=2e-2), (
        "Pallas kernel mismatch vs JAX reference")

    print("KERNEL_OK")
</pallas_src>

<mosaic_0001>
module attributes {stable_mosaic.version = 11 : i64} {
  func.func @_disc_kernel(%arg0: memref<32xf32, #tpu.memory_space<smem>>, %arg1: memref<2x120x203xbf16, #tpu.memory_space<vmem>>, %arg2: memref<8x100xbf16, #tpu.memory_space<vmem>>, %arg3: memref<2x203x256xbf16, #tpu.memory_space<vmem>>, %arg4: memref<100x256xbf16, #tpu.memory_space<vmem>>, %arg5: memref<3x256xf32, #tpu.memory_space<vmem>>, %arg6: memref<256x128xbf16, #tpu.memory_space<vmem>>, %arg7: memref<2x128xf32, #tpu.memory_space<vmem>>, %arg8: memref<8x1xf32, #tpu.memory_space<vmem>>) attributes {dimension_semantics = [], scalar_prefetch = 0 : i64, scratch_operands = 0 : i64, tpu.core_type = #tpu.core_type<tc>} {
    %c0 = arith.constant 0 : index
    %c0_0 = arith.constant 0 : index
    %0 = vector.load %arg7[%c0, %c0_0] : memref<2x128xf32, #tpu.memory_space<vmem>>, vector<1x128xf32>
    %c1 = arith.constant 1 : index
    %c0_1 = arith.constant 0 : index
    %1 = vector.load %arg7[%c1, %c0_1] : memref<2x128xf32, #tpu.memory_space<vmem>>, vector<1x128xf32>
    %c0_2 = arith.constant 0 : index
    %c0_3 = arith.constant 0 : index
    %2 = vector.load %arg6[%c0_2, %c0_3] : memref<256x128xbf16, #tpu.memory_space<vmem>>, vector<256x128xbf16>
    %c0_4 = arith.constant 0 : index
    %c0_5 = arith.constant 0 : index
    %c0_6 = arith.constant 0 : index
    %3 = vector.load %arg1[%c0_4, %c0_5, %c0_6] : memref<2x120x203xbf16, #tpu.memory_space<vmem>>, vector<1x120x203xbf16>
    %4 = vector.shape_cast %3 : vector<1x120x203xbf16> to vector<120x203xbf16>
    %c0_7 = arith.constant 0 : index
    %c0_8 = arith.constant 0 : index
    %c0_9 = arith.constant 0 : index
    %5 = vector.load %arg3[%c0_7, %c0_8, %c0_9] : memref<2x203x256xbf16, #tpu.memory_space<vmem>>, vector<1x203x256xbf16>
    %6 = vector.shape_cast %5 : vector<1x203x256xbf16> to vector<203x256xbf16>
    %cst = arith.constant dense<0.000000e+00> : vector<120x256xf32>
    %7 = tpu.matmul %4, %6, %cst {dimension_numbers = #tpu.dot_dimension_numbers<[1], [0], [0], [1], [0, 0, 1, 1], [], []>} : vector<120x203xbf16>, vector<203x256xbf16>, vector<120x256xf32> -> vector<120x256xf32>
    %c0_10 = arith.constant 0 : index
    %c0_11 = arith.constant 0 : index
    %8 = vector.load %arg5[%c0_10, %c0_11] : memref<3x256xf32, #tpu.memory_space<vmem>>, vector<1x256xf32>
    %9 = vector.broadcast %8 : vector<1x256xf32> to vector<120x256xf32>
    %10 = arith.addf %7, %9 : vector<120x256xf32>
    %cst_12 = arith.constant 2.000000e-01 : f32
    %11 = vector.broadcast %cst_12 : f32 to vector<120x256xf32>
    %12 = arith.mulf %11, %10 : vector<120x256xf32>
    %13 = arith.maximumf %10, %12 : vector<120x256xf32>
    %14 = arith.truncf %13 : vector<120x256xf32> to vector<120x256xbf16>
    %cst_13 = arith.constant dense<0.000000e+00> : vector<120x128xf32>
    %15 = tpu.matmul %14, %2, %cst_13 {dimension_numbers = #tpu.dot_dimension_numbers<[1], [0], [0], [1], [0, 0, 1, 1], [], []>} : vector<120x256xbf16>, vector<256x128xbf16>, vector<120x128xf32> -> vector<120x128xf32>
    %16 = vector.broadcast %0 : vector<1x128xf32> to vector<120x128xf32>
    %17 = arith.addf %15, %16 : vector<120x128xf32>
    %cst_14 = arith.constant 2.000000e-01 : f32
    %18 = vector.broadcast %cst_14 : f32 to vector<120x128xf32>
    %19 = arith.mulf %18, %17 : vector<120x128xf32>
    %20 = arith.maximumf %17, %19 : vector<120x128xf32>
    %21 = vector.extract_strided_slice %20 {offsets = [0, 0], sizes = [8, 128], strides = [1, 1]} : vector<120x128xf32> to vector<8x128xf32>
    %c0_15 = arith.constant 0 : index
    %22 = memref.load %arg0[%c0_15] : memref<32xf32, #tpu.memory_space<smem>>
    %23 = vector.broadcast %22 : f32 to vector<8x128xf32>
    %24 = arith.mulf %21, %23 : vector<8x128xf32>
    %25 = vector.extract_strided_slice %20 {offsets = [8, 0], sizes = [8, 128], strides = [1, 1]} : vector<120x128xf32> to vector<8x128xf32>
    %c1_16 = arith.constant 1 : index
    %26 = memref.load %arg0[%c1_16] : memref<32xf32, #tpu.memory_space<smem>>
    %27 = vector.broadcast %26 : f32 to vector<8x128xf32>
    %28 = arith.mulf %25, %27 : vector<8x128xf32>
    %29 = vector.extract_strided_slice %20 {offsets = [16, 0], sizes = [8, 128], strides = [1, 1]} : vector<120x128xf32> to vector<8x128xf32>
    %c2 = arith.constant 2 : index
    %30 = memref.load %arg0[%c2] : memref<32xf32, #tpu.memory_space<smem>>
    %31 = vector.broadcast %30 : f32 to vector<8x128xf32>
    %32 = arith.mulf %29, %31 : vector<8x128xf32>
    %33 = vector.extract_strided_slice %20 {offsets = [24, 0], sizes = [8, 128], strides = [1, 1]} : vector<120x128xf32> to vector<8x128xf32>
    %c3 = arith.constant 3 : index
    %34 = memref.load %arg0[%c3] : memref<32xf32, #tpu.memory_space<smem>>
    %35 = vector.broadcast %34 : f32 to vector<8x128xf32>
    %36 = arith.mulf %33, %35 : vector<8x128xf32>
    %37 = vector.extract_strided_slice %20 {offsets = [32, 0], sizes = [8, 128], strides = [1, 1]} : vector<120x128xf32> to vector<8x128xf32>
    %c4 = arith.constant 4 : index
    %38 = memref.load %arg0[%c4] : memref<32xf32, #tpu.memory_space<smem>>
    %39 = vector.broadcast %38 : f32 to vector<8x128xf32>
    %40 = arith.mulf %37, %39 : vector<8x128xf32>
    %41 = vector.extract_strided_slice %20 {offsets = [40, 0], sizes = [8, 128], strides = [1, 1]} : vector<120x128xf32> to vector<8x128xf32>
    %c5 = arith.constant 5 : index
    %42 = memref.load %arg0[%c5] : memref<32xf32, #tpu.memory_space<smem>>
    %43 = vector.broadcast %42 : f32 to vector<8x128xf32>
    %44 = arith.mulf %41, %43 : vector<8x128xf32>
    %45 = vector.extract_strided_slice %20 {offsets = [48, 0], sizes = [8, 128], strides = [1, 1]} : vector<120x128xf32> to vector<8x128xf32>
    %c6 = arith.constant 6 : index
    %46 = memref.load %arg0[%c6] : memref<32xf32, #tpu.memory_space<smem>>
    %47 = vector.broadcast %46 : f32 to vector<8x128xf32>
    %48 = arith.mulf %45, %47 : vector<8x128xf32>
    %49 = vector.extract_strided_slice %20 {offsets = [56, 0], sizes = [8, 128], strides = [1, 1]} : vector<120x128xf32> to vector<8x128xf32>
    %c7 = arith.constant 7 : index
    %50 = memref.load %arg0[%c7] : memref<32xf32, #tpu.memory_space<smem>>
    %51 = vector.broadcast %50 : f32 to vector<8x128xf32>
    %52 = arith.mulf %49, %51 : vector<8x128xf32>
    %53 = vector.extract_strided_slice %20 {offsets = [64, 0], sizes = [8, 128], strides = [1, 1]} : vector<120x128xf32> to vector<8x128xf32>
    %c8 = arith.constant 8 : index
    %54 = memref.load %arg0[%c8] : memref<32xf32, #tpu.memory_space<smem>>
    %55 = vector.broadcast %54 : f32 to vector<8x128xf32>
    %56 = arith.mulf %53, %55 : vector<8x128xf32>
    %57 = vector.extract_strided_slice %20 {offsets = [72, 0], sizes = [8, 128], strides = [1, 1]} : vector<120x128xf32> to vector<8x128xf32>
    %c9 = arith.constant 9 : index
    %58 = memref.load %arg0[%c9] : memref<32xf32, #tpu.memory_space<smem>>
    %59 = vector.broadcast %58 : f32 to vector<8x128xf32>
    %60 = arith.mulf %57, %59 : vector<8x128xf32>
    %61 = vector.extract_strided_slice %20 {offsets = [80, 0], sizes = [8, 128], strides = [1, 1]} : vector<120x128xf32> to vector<8x128xf32>
    %c10 = arith.constant 10 : index
    %62 = memref.load %arg0[%c10] : memref<32xf32, #tpu.memory_space<smem>>
    %63 = vector.broadcast %62 : f32 to vector<8x128xf32>
    %64 = arith.mulf %61, %63 : vector<8x128xf32>
    %65 = vector.extract_strided_slice %20 {offsets = [88, 0], sizes = [8, 128], strides = [1, 1]} : vector<120x128xf32> to vector<8x128xf32>
    %c11 = arith.constant 11 : index
    %66 = memref.load %arg0[%c11] : memref<32xf32, #tpu.memory_space<smem>>
    %67 = vector.broadcast %66 : f32 to vector<8x128xf32>
    %68 = arith.mulf %65, %67 : vector<8x128xf32>
    %69 = vector.extract_strided_slice %20 {offsets = [96, 0], sizes = [8, 128], strides = [1, 1]} : vector<120x128xf32> to vector<8x128xf32>
    %c12 = arith.constant 12 : index
    %70 = memref.load %arg0[%c12] : memref<32xf32, #tpu.memory_space<smem>>
    %71 = vector.broadcast %70 : f32 to vector<8x128xf32>
    %72 = arith.mulf %69, %71 : vector<8x128xf32>
    %73 = vector.extract_strided_slice %20 {offsets = [104, 0], sizes = [8, 128], strides = [1, 1]} : vector<120x128xf32> to vector<8x128xf32>
    %c13 = arith.constant 13 : index
    %74 = memref.load %arg0[%c13] : memref<32xf32, #tpu.memory_space<smem>>
    %75 = vector.broadcast %74 : f32 to vector<8x128xf32>
    %76 = arith.mulf %73, %75 : vector<8x128xf32>
    %77 = vector.extract_strided_slice %20 {offsets = [112, 0], sizes = [8, 128], strides = [1, 1]} : vector<120x128xf32> to vector<8x128xf32>
    %c14 = arith.constant 14 : index
    %78 = memref.load %arg0[%c14] : memref<32xf32, #tpu.memory_space<smem>>
    %79 = vector.broadcast %78 : f32 to vector<8x128xf32>
    %80 = arith.mulf %77, %79 : vector<8x128xf32>
    %81 = arith.addf %24, %28 : vector<8x128xf32>
    %82 = arith.addf %32, %36 : vector<8x128xf32>
    %83 = arith.addf %40, %44 : vector<8x128xf32>
    %84 = arith.addf %48, %52 : vector<8x128xf32>
    %85 = arith.addf %56, %60 : vector<8x128xf32>
    %86 = arith.addf %64, %68 : vector<8x128xf32>
    %87 = arith.addf %72, %76 : vector<8x128xf32>
    %88 = arith.addf %81, %82 : vector<8x128xf32>
    %89 = arith.addf %83, %84 : vector<8x128xf32>
    %90 = arith.addf %85, %86 : vector<8x128xf32>
    %91 = arith.addf %87, %80 : vector<8x128xf32>
    %92 = arith.addf %88, %89 : vector<8x128xf32>
    %93 = arith.addf %90, %91 : vector<8x128xf32>
    %94 = arith.addf %92, %93 : vector<8x128xf32>
    %c0_17 = arith.constant 0 : index
    %c0_18 = arith.constant 0 : index
    %95 = vector.load %arg2[%c0_17, %c0_18] : memref<8x100xbf16, #tpu.memory_space<vmem>>, vector<8x100xbf16>
    %c0_19 = arith.constant 0 : index
    %c0_20 = arith.constant 0 : index
    %96 = vector.load %arg4[%c0_19, %c0_20] : memref<100x256xbf16, #tpu.memory_space<vmem>>, vector<100x256xbf16>
    %cst_21 = arith.constant dense<0.000000e+00> : vector<8x256xf32>
    %97 = tpu.matmul %95, %96, %cst_21 {dimension_numbers = #tpu.dot_dimension_numbers<[1], [0], [0], [1], [0, 0, 1, 1], [], []>} : vector<8x100xbf16>, vector<100x256xbf16>, vector<8x256xf32> -> vector<8x256xf32>
    %c1_22 = arith.constant 1 : index
    %c0_23 = arith.constant 0 : index
    %98 = vector.load %arg5[%c1_22, %c0_23] : memref<3x256xf32, #tpu.memory_space<vmem>>, vector<1x256xf32>
    %99 = vector.broadcast %98 : vector<1x256xf32> to vector<8x256xf32>
    %100 = arith.addf %97, %99 : vector<8x256xf32>
    %cst_24 = arith.constant 2.000000e-01 : f32
    %101 = vector.broadcast %cst_24 : f32 to vector<8x256xf32>
    %102 = arith.mulf %101, %100 : vector<8x256xf32>
    %103 = arith.maximumf %100, %102 : vector<8x256xf32>
    %104 = arith.truncf %103 : vector<8x256xf32> to vector<8x256xbf16>
    %cst_25 = arith.constant dense<0.000000e+00> : vector<8x128xf32>
    %105 = tpu.matmul %104, %2, %cst_25 {dimension_numbers = #tpu.dot_dimension_numbers<[1], [0], [0], [1], [0, 0, 1, 1], [], []>} : vector<8x256xbf16>, vector<256x128xbf16>, vector<8x128xf32> -> vector<8x128xf32>
    %106 = vector.broadcast %0 : vector<1x128xf32> to vector<8x128xf32>
    %107 = arith.addf %105, %106 : vector<8x128xf32>
    %cst_26 = arith.constant 2.000000e-01 : f32
    %108 = vector.broadcast %cst_26 : f32 to vector<8x128xf32>
    %109 = arith.mulf %108, %107 : vector<8x128xf32>
    %110 = arith.maximumf %107, %109 : vector<8x128xf32>
    %c15 = arith.constant 15 : index
    %111 = memref.load %arg0[%c15] : memref<32xf32, #tpu.memory_space<smem>>
    %112 = vector.broadcast %111 : f32 to vector<8x128xf32>
    %113 = arith.mulf %110, %112 : vector<8x128xf32>
    %114 = arith.addf %94, %113 : vector<8x128xf32>
    %c1_27 = arith.constant 1 : index
    %c0_28 = arith.constant 0 : index
    %c0_29 = arith.constant 0 : index
    %115 = vector.load %arg1[%c1_27, %c0_28, %c0_29] : memref<2x120x203xbf16, #tpu.memory_space<vmem>>, vector<1x120x203xbf16>
    %116 = vector.shape_cast %115 : vector<1x120x203xbf16> to vector<120x203xbf16>
    %c1_30 = arith.constant 1 : index
    %c0_31 = arith.constant 0 : index
    %c0_32 = arith.constant 0 : index
    %117 = vector.load %arg3[%c1_30, %c0_31, %c0_32] : memref<2x203x256xbf16, #tpu.memory_space<vmem>>, vector<1x203x256xbf16>
    %118 = vector.shape_cast %117 : vector<1x203x256xbf16> to vector<203x256xbf16>
    %cst_33 = arith.constant dense<0.000000e+00> : vector<120x256xf32>
    %119 = tpu.matmul %116, %118, %cst_33 {dimension_numbers = #tpu.dot_dimension_numbers<[1], [0], [0], [1], [0, 0, 1, 1], [], []>} : vector<120x203xbf16>, vector<203x256xbf16>, vector<120x256xf32> -> vector<120x256xf32>
    %c2_34 = arith.constant 2 : index
    %c0_35 = arith.constant 0 : index
    %120 = vector.load %arg5[%c2_34, %c0_35] : memref<3x256xf32, #tpu.memory_space<vmem>>, vector<1x256xf32>
    %121 = vector.broadcast %120 : vector<1x256xf32> to vector<120x256xf32>
    %122 = arith.addf %119, %121 : vector<120x256xf32>
    %cst_36 = arith.constant 2.000000e-01 : f32
    %123 = vector.broadcast %cst_36 : f32 to vector<120x256xf32>
    %124 = arith.mulf %123, %122 : vector<120x256xf32>
    %125 = arith.maximumf %122, %124 : vector<120x256xf32>
    %126 = arith.truncf %125 : vector<120x256xf32> to vector<120x256xbf16>
    %cst_37 = arith.constant dense<0.000000e+00> : vector<120x128xf32>
    %127 = tpu.matmul %126, %2, %cst_37 {dimension_numbers = #tpu.dot_dimension_numbers<[1], [0], [0], [1], [0, 0, 1, 1], [], []>} : vector<120x256xbf16>, vector<256x128xbf16>, vector<120x128xf32> -> vector<120x128xf32>
    %128 = vector.broadcast %0 : vector<1x128xf32> to vector<120x128xf32>
    %129 = arith.addf %127, %128 : vector<120x128xf32>
    %cst_38 = arith.constant 2.000000e-01 : f32
    %130 = vector.broadcast %cst_38 : f32 to vector<120x128xf32>
    %131 = arith.mulf %130, %129 : vector<120x128xf32>
    %132 = arith.maximumf %129, %131 : vector<120x128xf32>
    %133 = vector.extract_strided_slice %132 {offsets = [0, 0], sizes = [8, 128], strides = [1, 1]} : vector<120x128xf32> to vector<8x128xf32>
    %c17 = arith.constant 17 : index
    %134 = memref.load %arg0[%c17] : memref<32xf32, #tpu.memory_space<smem>>
    %135 = vector.broadcast %134 : f32 to vector<8x128xf32>
    %136 = arith.mulf %133, %135 : vector<8x128xf32>
    %137 = vector.extract_strided_slice %132 {offsets = [8, 0], sizes = [8, 128], strides = [1, 1]} : vector<120x128xf32> to vector<8x128xf32>
    %c18 = arith.constant 18 : index
    %138 = memref.load %arg0[%c18] : memref<32xf32, #tpu.memory_space<smem>>
    %139 = vector.broadcast %138 : f32 to vector<8x128xf32>
    %140 = arith.mulf %137, %139 : vector<8x128xf32>
    %141 = vector.extract_strided_slice %132 {offsets = [16, 0], sizes = [8, 128], strides = [1, 1]} : vector<120x128xf32> to vector<8x128xf32>
    %c19 = arith.constant 19 : index
    %142 = memref.load %arg0[%c19] : memref<32xf32, #tpu.memory_space<smem>>
    %143 = vector.broadcast %142 : f32 to vector<8x128xf32>
    %144 = arith.mulf %141, %143 : vector<8x128xf32>
    %145 = vector.extract_strided_slice %132 {offsets = [24, 0], sizes = [8, 128], strides = [1, 1]} : vector<120x128xf32> to vector<8x128xf32>
    %c20 = arith.constant 20 : index
    %146 = memref.load %arg0[%c20] : memref<32xf32, #tpu.memory_space<smem>>
    %147 = vector.broadcast %146 : f32 to vector<8x128xf32>
    %148 = arith.mulf %145, %147 : vector<8x128xf32>
    %149 = vector.extract_strided_slice %132 {offsets = [32, 0], sizes = [8, 128], strides = [1, 1]} : vector<120x128xf32> to vector<8x128xf32>
    %c21 = arith.constant 21 : index
    %150 = memref.load %arg0[%c21] : memref<32xf32, #tpu.memory_space<smem>>
    %151 = vector.broadcast %150 : f32 to vector<8x128xf32>
    %152 = arith.mulf %149, %151 : vector<8x128xf32>
    %153 = vector.extract_strided_slice %132 {offsets = [40, 0], sizes = [8, 128], strides = [1, 1]} : vector<120x128xf32> to vector<8x128xf32>
    %c22 = arith.constant 22 : index
    %154 = memref.load %arg0[%c22] : memref<32xf32, #tpu.memory_space<smem>>
    %155 = vector.broadcast %154 : f32 to vector<8x128xf32>
    %156 = arith.mulf %153, %155 : vector<8x128xf32>
    %157 = vector.extract_strided_slice %132 {offsets = [48, 0], sizes = [8, 128], strides = [1, 1]} : vector<120x128xf32> to vector<8x128xf32>
    %c23 = arith.constant 23 : index
    %158 = memref.load %arg0[%c23] : memref<32xf32, #tpu.memory_space<smem>>
    %159 = vector.broadcast %158 : f32 to vector<8x128xf32>
    %160 = arith.mulf %157, %159 : vector<8x128xf32>
    %161 = vector.extract_strided_slice %132 {offsets = [56, 0], sizes = [8, 128], strides = [1, 1]} : vector<120x128xf32> to vector<8x128xf32>
    %c24 = arith.constant 24 : index
    %162 = memref.load %arg0[%c24] : memref<32xf32, #tpu.memory_space<smem>>
    %163 = vector.broadcast %162 : f32 to vector<8x128xf32>
    %164 = arith.mulf %161, %163 : vector<8x128xf32>
    %165 = vector.extract_strided_slice %132 {offsets = [64, 0], sizes = [8, 128], strides = [1, 1]} : vector<120x128xf32> to vector<8x128xf32>
    %c25 = arith.constant 25 : index
    %166 = memref.load %arg0[%c25] : memref<32xf32, #tpu.memory_space<smem>>
    %167 = vector.broadcast %166 : f32 to vector<8x128xf32>
    %168 = arith.mulf %165, %167 : vector<8x128xf32>
    %169 = vector.extract_strided_slice %132 {offsets = [72, 0], sizes = [8, 128], strides = [1, 1]} : vector<120x128xf32> to vector<8x128xf32>
    %c26 = arith.constant 26 : index
    %170 = memref.load %arg0[%c26] : memref<32xf32, #tpu.memory_space<smem>>
    %171 = vector.broadcast %170 : f32 to vector<8x128xf32>
    %172 = arith.mulf %169, %171 : vector<8x128xf32>
    %173 = vector.extract_strided_slice %132 {offsets = [80, 0], sizes = [8, 128], strides = [1, 1]} : vector<120x128xf32> to vector<8x128xf32>
    %c27 = arith.constant 27 : index
    %174 = memref.load %arg0[%c27] : memref<32xf32, #tpu.memory_space<smem>>
    %175 = vector.broadcast %174 : f32 to vector<8x128xf32>
    %176 = arith.mulf %173, %175 : vector<8x128xf32>
    %177 = vector.extract_strided_slice %132 {offsets = [88, 0], sizes = [8, 128], strides = [1, 1]} : vector<120x128xf32> to vector<8x128xf32>
    %c28 = arith.constant 28 : index
    %178 = memref.load %arg0[%c28] : memref<32xf32, #tpu.memory_space<smem>>
    %179 = vector.broadcast %178 : f32 to vector<8x128xf32>
    %180 = arith.mulf %177, %179 : vector<8x128xf32>
    %181 = vector.extract_strided_slice %132 {offsets = [96, 0], sizes = [8, 128], strides = [1, 1]} : vector<120x128xf32> to vector<8x128xf32>
    %c29 = arith.constant 29 : index
    %182 = memref.load %arg0[%c29] : memref<32xf32, #tpu.memory_space<smem>>
    %183 = vector.broadcast %182 : f32 to vector<8x128xf32>
    %184 = arith.mulf %181, %183 : vector<8x128xf32>
    %185 = vector.extract_strided_slice %132 {offsets = [104, 0], sizes = [8, 128], strides = [1, 1]} : vector<120x128xf32> to vector<8x128xf32>
    %c30 = arith.constant 30 : index
    %186 = memref.load %arg0[%c30] : memref<32xf32, #tpu.memory_space<smem>>
    %187 = vector.broadcast %186 : f32 to vector<8x128xf32>
    %188 = arith.mulf %185, %187 : vector<8x128xf32>
    %189 = vector.extract_strided_slice %132 {offsets = [112, 0], sizes = [8, 128], strides = [1, 1]} : vector<120x128xf32> to vector<8x128xf32>
    %c31 = arith.constant 31 : index
    %190 = memref.load %arg0[%c31] : memref<32xf32, #tpu.memory_space<smem>>
    %191 = vector.broadcast %190 : f32 to vector<8x128xf32>
    %192 = arith.mulf %189, %191 : vector<8x128xf32>
    %193 = arith.addf %136, %140 : vector<8x128xf32>
    %194 = arith.addf %144, %148 : vector<8x128xf32>
    %195 = arith.addf %152, %156 : vector<8x128xf32>
    %196 = arith.addf %160, %164 : vector<8x128xf32>
    %197 = arith.addf %168, %172 : vector<8x128xf32>
    %198 = arith.addf %176, %180 : vector<8x128xf32>
    %199 = arith.addf %184, %188 : vector<8x128xf32>
    %200 = arith.addf %193, %194 : vector<8x128xf32>
    %201 = arith.addf %195, %196 : vector<8x128xf32>
    %202 = arith.addf %197, %198 : vector<8x128xf32>
    %203 = arith.addf %199, %192 : vector<8x128xf32>
    %204 = arith.addf %200, %201 : vector<8x128xf32>
    %205 = arith.addf %202, %203 : vector<8x128xf32>
    %206 = arith.addf %204, %205 : vector<8x128xf32>
    %207 = arith.addf %114, %206 : vector<8x128xf32>
    %208 = vector.broadcast %1 : vector<1x128xf32> to vector<8x128xf32>
    %209 = arith.mulf %207, %208 : vector<8x128xf32>
    %cst_39 = arith.constant dense<0.000000e+00> : vector<8xf32>
    %210 = vector.multi_reduction <add>, %209, %cst_39 [1] : vector<8x128xf32> to vector<8xf32>
    %211 = vector.shape_cast %210 : vector<8xf32> to vector<8x1xf32>
    %c0_40 = arith.constant 0 : index
    %c0_41 = arith.constant 0 : index
    %212 = vector.load %arg8[%c0_40, %c0_41] : memref<8x1xf32, #tpu.memory_space<vmem>>, vector<8x1xf32>
    tpu.vector_store %arg8[%c0_40, %c0_41], %211 {strides = array<i32>} : memref<8x1xf32, #tpu.memory_space<vmem>>, vector<8x1xf32>,
    return
  }
}

</mosaic_0001>

<llo_original>
// kernel: gan_discriminator_forward.1
$region0: #{gan_discriminator_forward.1}
  #allocation0 [shape = 'u32[]', space=smem, size = 0x4, offset = 0x4, fixed_abs, tag = 'smem constant byte address 0x4 - core index']
  #allocation1 [shape = 'u32[144,128]{1,0:T(1,128)}', space=vmem, size = 0x12000, scoped, tag = 'internal scratch']
  %s0 = inlined_call_operand.vmem [shape: f32[32], index: 0, kind: input, shape index: {}]
  %s1 = inlined_call_operand.vmem [shape: bf16[2,120,203], index: 1, kind: input, shape index: {}]
  %s2 = inlined_call_operand.vmem [shape: bf16[8,100], index: 2, kind: input, shape index: {}]
  %s3 = inlined_call_operand.vmem [shape: bf16[2,203,256], index: 3, kind: input, shape index: {}]
  %s4 = inlined_call_operand.vmem [shape: bf16[100,256], index: 4, kind: input, shape index: {}]
  %s5 = inlined_call_operand.vmem [shape: f32[3,256], index: 5, kind: input, shape index: {}]
  %s6 = inlined_call_operand.vmem [shape: bf16[256,128], index: 6, kind: input, shape index: {}]
  %s7 = inlined_call_operand.vmem [shape: f32[2,128], index: 7, kind: input, shape index: {}]
  %s8 = inlined_call_operand.vmem [shape: f32[8,1], index: 8, kind: output, shape index: {}]
  %s9 = sld [smem:[#allocation0]]
  $region46: #{gan_discriminator_forward.1} parent=0
    _
  %s11 = ssub.s32 1, %s9
  %s12 = scalar_select 0, %s11, %s9
  $region1: #{gan_discriminator_forward.1} parent=0
    #allocation2 [shape = 'u8[512]{0}', space=smem, size = 0x200, scoped, tag = 'input window, operand 0, single buffered']
    #allocation3 [shape = 's32[1]{0}', space=sflag, size = 0x4, scoped, tag = 'scoped memory for gan_discriminator_forward.1']
    %13 = vsyncpa [#allocation3], 0
    // Predicated region
    $region2: #{gan_discriminator_forward.1} parent=1 // pred_check
      _
    $region3: #{gan_discriminator_forward.1} parent=1 // pred_check_branch
      %15 = sbr.rel (0) target = $region5
    $region4: #{gan_discriminator_forward.1} parent=1 // pred_region
      %s17 = ssub.s32 16, 16
      %18 = vsyncadd [#allocation3], %s17
      %s20 = sshll.u32 %s0, 4
      %s21 = int_to_ptr.vmem [resolvable:$true] %s20
      %23 = dma.vmem_to_smem %s21, 16, [#allocation2], [#allocation3]
    $region5: #{gan_discriminator_forward.1} parent=1 // pred_fallthru
      _
    // Predicated region
    $region6: #{gan_discriminator_forward.1} parent=1 // pred_check
      _
    $region7: #{gan_discriminator_forward.1} parent=1 // pred_check_branch
      %25 = sbr.rel (0) target = $region9
    $region8: #{gan_discriminator_forward.1} parent=1 // pred_region
      _
    $region9: #{gan_discriminator_forward.1} parent=1 // pred_fallthru
      _
    // Predicated region
    $region10: #{gan_discriminator_forward.1} parent=1 // pred_check
      _
    $region11: #{gan_discriminator_forward.1} parent=1 // pred_check_branch
      %27 = sbr.rel (0) target = $region13
    $region12: #{gan_discriminator_forward.1} parent=1 // pred_region
      _
    $region13: #{gan_discriminator_forward.1} parent=1 // pred_fallthru
      _
    // Predicated region
    $region14: #{gan_discriminator_forward.1} parent=1 // pred_check
      _
    $region15: #{gan_discriminator_forward.1} parent=1 // pred_check_branch
      %29 = sbr.rel (0) target = $region17
    $region16: #{gan_discriminator_forward.1} parent=1 // pred_region
      _
    $region17: #{gan_discriminator_forward.1} parent=1 // pred_fallthru
      _
    // Predicated region
    $region18: #{gan_discriminator_forward.1} parent=1 // pred_check
      _
    $region19: #{gan_discriminator_forward.1} parent=1 // pred_check_branch
      %31 = sbr.rel (0) target = $region21
    $region20: #{gan_discriminator_forward.1} parent=1 // pred_region
      _
    $region21: #{gan_discriminator_forward.1} parent=1 // pred_fallthru
      _
    // Predicated region
    $region22: #{gan_discriminator_forward.1} parent=1 // pred_check
      _
    $region23: #{gan_discriminator_forward.1} parent=1 // pred_check_branch
      %33 = sbr.rel (0) target = $region25
    $region24: #{gan_discriminator_forward.1} parent=1 // pred_region
      _
    $region25: #{gan_discriminator_forward.1} parent=1 // pred_fallthru
      _
    // Predicated region
    $region26: #{gan_discriminator_forward.1} parent=1 // pred_check
      _
    $region27: #{gan_discriminator_forward.1} parent=1 // pred_check_branch
      %35 = sbr.rel (0) target = $region29
    $region28: #{gan_discriminator_forward.1} parent=1 // pred_region
      _
    $region29: #{gan_discriminator_forward.1} parent=1 // pred_fallthru
      _
    // Predicated region
    $region30: #{gan_discriminator_forward.1} parent=1 // pred_check
      _
    $region31: #{gan_discriminator_forward.1} parent=1 // pred_check_branch
      %37 = sbr.rel (0) target = $region33
    $region32: #{gan_discriminator_forward.1} parent=1 // pred_region
      _
    $region33: #{gan_discriminator_forward.1} parent=1 // pred_fallthru
      _
    // Predicated region
    $region34: #{gan_discriminator_forward.1} parent=1 // pred_check
      _
    $region35: #{gan_discriminator_forward.1} parent=1 // pred_check_branch
      %39 = sbr.rel (0) target = $region37
    $region36: #{gan_discriminator_forward.1} parent=1 // pred_region
      %40 = dma.done [#allocation3], 16
    $region37: #{gan_discriminator_forward.1} parent=1 // pred_fallthru
      _
    %41 = sfence
    %v43 = vld [vmem:[%s7] sm:$0x1]
    %v44 = vld [vmem:[%s7 + $0x1] sm:$0x1]
    %v45 = vld [vmem:[%s6] sm:$0xf]
    %v46 = vld [vmem:[%s6 + $0x4] sm:$0xf]
    %v47 = vld [vmem:[%s6 + $0x8] sm:$0xf]
    %v48 = vld [vmem:[%s6 + $0xc] sm:$0xf]
    %v49 = vld [vmem:[%s6 + $0x10] sm:$0xf]
    %v50 = vld [vmem:[%s6 + $0x14] sm:$0xf]
    %v51 = vld [vmem:[%s6 + $0x18] sm:$0xf]
    %v52 = vld [vmem:[%s6 + $0x1c] sm:$0xf]
    %v53 = vld [vmem:[%s6 + $0x20] sm:$0xf]
    %v54 = vld [vmem:[%s6 + $0x24] sm:$0xf]
    %v55 = vld [vmem:[%s6 + $0x28] sm:$0xf]
    %v56 = vld [vmem:[%s6 + $0x2c] sm:$0xf]
    %v57 = vld [vmem:[%s6 + $0x30] sm:$0xf]
    %v58 = vld [vmem:[%s6 + $0x34] sm:$0xf]
    %v59 = vld [vmem:[%s6 + $0x38] sm:$0xf]
    %v60 = vld [vmem:[%s6 + $0x3c] sm:$0xf]
    %v61 = vld [vmem:[%s6 + $0x40] sm:$0xf]
    %v62 = vld [vmem:[%s6 + $0x44] sm:$0xf]
    %v63 = vld [vmem:[%s6 + $0x48] sm:$0xf]
    %v64 = vld [vmem:[%s6 + $0x4c] sm:$0xf]
    %v65 = vld [vmem:[%s6 + $0x50] sm:$0xf]
    %v66 = vld [vmem:[%s6 + $0x54] sm:$0xf]
    %v67 = vld [vmem:[%s6 + $0x58] sm:$0xf]
    %v68 = vld [vmem:[%s6 + $0x5c] sm:$0xf]
    %v69 = vld [vmem:[%s6 + $0x60] sm:$0xf]
    %v70 = vld [vmem:[%s6 + $0x64] sm:$0xf]
    %v71 = vld [vmem:[%s6 + $0x68] sm:$0xf]
    %v72 = vld [vmem:[%s6 + $0x6c] sm:$0xf]
    %v73 = vld [vmem:[%s6 + $0x70] sm:$0xf]
    %v74 = vld [vmem:[%s6 + $0x74] sm:$0xf]
    %v75 = vld [vmem:[%s6 + $0x78] sm:$0xf]
    %v76 = vld [vmem:[%s6 + $0x7c] sm:$0xf]
    %v77 = vld [vmem:[%s1] sm:$0xff]
    %v78 = vld [vmem:[%s1 + $0x8] sm:$0xff]
    %v79 = vld [vmem:[%s1 + $0x10] sm:$0xff]
    %v80 = vld [vmem:[%s1 + $0x18] sm:$0xff]
    %v81 = vld [vmem:[%s1 + $0x20] sm:$0xff]
    %v82 = vld [vmem:[%s1 + $0x28] sm:$0xff]
    %v83 = vld [vmem:[%s1 + $0x30] sm:$0xff]
    %v84 = vld [vmem:[%s1 + $0x38] sm:$0xff]
    %v85 = vld [vmem:[%s1 + $0x40] sm:$0xff]
    %v86 = vld [vmem:[%s1 + $0x48] sm:$0xff]
    %v87 = vld [vmem:[%s1 + $0x50] sm:$0xff]
    %v88 = vld [vmem:[%s1 + $0x58] sm:$0xff]
    %v89 = vld [vmem:[%s1 + $0x60] sm:$0xff]
    %v90 = vld [vmem:[%s1 + $0x68] sm:$0xff]
    %v91 = vld [vmem:[%s1 + $0x70] sm:$0xff]
    %v92 = vld [vmem:[%s3] sm:$0xff]
    %v93 = vld [vmem:[%s3 + $0x8] sm:$0xff]
    %v94 = vld [vmem:[%s3 + $0x10] sm:$0xff]
    %v95 = vld [vmem:[%s3 + $0x18] sm:$0xff]
    %v96 = vld [vmem:[%s3 + $0x20] sm:$0xff]
    %v97 = vld [vmem:[%s3 + $0x28] sm:$0xff]
    %v98 = vld [vmem:[%s3 + $0x30] sm:$0xff]
    %v99 = vld [vmem:[%s3 + $0x38] sm:$0xff]
    %v100 = vld [vmem:[%s3 + $0x40] sm:$0xff]
    %v101 = vld [vmem:[%s3 + $0x48] sm:$0xff]
    %v102 = vld [vmem:[%s3 + $0x50] sm:$0xff]
    %v103 = vld [vmem:[%s3 + $0x58] sm:$0xff]
    %v104 = vld [vmem:[%s3 + $0x60] sm:$0xff]
    %v105 = vld [vmem:[%s3 + $0x68] sm:$0xff]
    %v106 = vld [vmem:[%s3 + $0x70] sm:$0xff]
    %v107 = vld [vmem:[%s3 + $0x78] sm:$0xff]
    %v108 = vld [vmem:[%s3 + $0x80] sm:$0xff]
    %v109 = vld [vmem:[%s3 + $0x88] sm:$0xff]
    %v110 = vld [vmem:[%s3 + $0x90] sm:$0xff]
    %v111 = vld [vmem:[%s3 + $0x98] sm:$0xff]
    %v112 = vld [vmem:[%s3 + $0xa0] sm:$0xff]
    %v113 = vld [vmem:[%s3 + $0xa8] sm:$0xff]
    %v114 = vld [vmem:[%s3 + $0xb0] sm:$0xff]
    %v115 = vld [vmem:[%s3 + $0xb8] sm:$0xff]
    %v116 = vld [vmem:[%s3 + $0xc0] sm:$0xff]
    %v117 = vld [vmem:[%s3 + $0xc8] sm:$0x33]
    %v118 = vld [vmem:[%s5] ss:$4 sm:$0x3]
    %v120 = vlaneseq
    %v121 = vshrl.u32 %v120, 7
    %v122 = vsub.s32 0, %v121
    %v123 = vrot.slane %v118, %v122
    %v124 = vlaneseq
    %v125 = vshrl.u32 %v124, 7
    %v126 = vsub.s32 1, %v125
    %v127 = vrot.slane %v118, %v126
    %v145 = vunpack.c.l.b16 %v77
    %v146 = vunpack.c.h.b16 %v77
    %v147 = vunpack.c.l.b16 %v78
    %v148 = vunpack.c.h.b16 %v78
    %v149 = vunpack.c.l.b16 %v79
    %v150 = vunpack.c.h.b16 %v79
    %v151 = vunpack.c.l.b16 %v80
    %v152 = vunpack.c.h.b16 %v80
    %v153 = vunpack.c.l.b16 %v81
    %v154 = vunpack.c.h.b16 %v81
    %v155 = vunpack.c.l.b16 %v82
    %v156 = vunpack.c.h.b16 %v82
    %v157 = vunpack.c.l.b16 %v83
    %v158 = vunpack.c.h.b16 %v83
    %v159 = vunpack.c.l.b16 %v84
    %v160 = vunpack.c.h.b16 %v84
    %v161 = vunpack.c.l.b16 %v85
    %v162 = vunpack.c.h.b16 %v85
    %v163 = vunpack.c.l.b16 %v86
    %v164 = vunpack.c.h.b16 %v86
    %v165 = vunpack.c.l.b16 %v87
    %v166 = vunpack.c.h.b16 %v87
    %v167 = vunpack.c.l.b16 %v88
    %v168 = vunpack.c.h.b16 %v88
    %v169 = vunpack.c.l.b16 %v89
    %v170 = vunpack.c.h.b16 %v89
    %v171 = vunpack.c.l.b16 %v90
    %v172 = vunpack.c.h.b16 %v90
    %v173 = vunpack.c.l.b16 %v91
    %v174 = vunpack.c.h.b16 %v91
    %v175 = vpack.c.b16 %v147, %v145
    %v176 = vpack.c.b16 %v148, %v146
    %v177 = vpack.c.b16 %v151, %v149
    %v178 = vpack.c.b16 %v152, %v150
    %v179 = vpack.c.b16 %v155, %v153
    %v180 = vpack.c.b16 %v156, %v154
    %v181 = vpack.c.b16 %v159, %v157
    %v182 = vpack.c.b16 %v160, %v158
    %v183 = vpack.c.b16 %v163, %v161
    %v184 = vpack.c.b16 %v164, %v162
    %v185 = vpack.c.b16 %v167, %v165
    %v186 = vpack.c.b16 %v168, %v166
    %v187 = vpack.c.b16 %v171, %v169
    %v188 = vpack.c.b16 %v172, %v170
    %v189 = vpack.c.b16 %v173, %v173
    %v190 = vpack.c.b16 %v174, %v174
    %v225 = vunpack.c.l.b16 %v92
    %v226 = vunpack.c.h.b16 %v92
    %v227 = vunpack.c.l.b16 %v93
    %v228 = vunpack.c.h.b16 %v93
    %v229 = vunpack.c.l.b16 %v94
    %v230 = vunpack.c.h.b16 %v94
    %v231 = vunpack.c.l.b16 %v95
    %v232 = vunpack.c.h.b16 %v95
    %v233 = vunpack.c.l.b16 %v96
    %v234 = vunpack.c.h.b16 %v96
    %v235 = vunpack.c.l.b16 %v97
    %v236 = vunpack.c.h.b16 %v97
    %v237 = vunpack.c.l.b16 %v98
    %v238 = vunpack.c.h.b16 %v98
    %v239 = vunpack.c.l.b16 %v99
    %v240 = vunpack.c.h.b16 %v99
    %v241 = vunpack.c.l.b16 %v100
    %v242 = vunpack.c.h.b16 %v100
    %v243 = vunpack.c.l.b16 %v101
    %v244 = vunpack.c.h.b16 %v101
    %v245 = vunpack.c.l.b16 %v102
    %v246 = vunpack.c.h.b16 %v102
    %v247 = vunpack.c.l.b16 %v103
    %v248 = vunpack.c.h.b16 %v103
    %v249 = vunpack.c.l.b16 %v104
    %v250 = vunpack.c.h.b16 %v104
    %v251 = vunpack.c.l.b16 %v105
    %v252 = vunpack.c.h.b16 %v105
    %v253 = vunpack.c.l.b16 %v106
    %v254 = vunpack.c.h.b16 %v106
    %v255 = vunpack.c.l.b16 %v107
    %v256 = vunpack.c.h.b16 %v107
    %v257 = vunpack.c.l.b16 %v108
    %v258 = vunpack.c.h.b16 %v108
    %v259 = vunpack.c.l.b16 %v109
    %v260 = vunpack.c.h.b16 %v109
    %v261 = vunpack.c.l.b16 %v110
    %v262 = vunpack.c.h.b16 %v110
    %v263 = vunpack.c.l.b16 %v111
    %v264 = vunpack.c.h.b16 %v111
    %v265 = vunpack.c.l.b16 %v112
    %v266 = vunpack.c.h.b16 %v112
    %v267 = vunpack.c.l.b16 %v113
    %v268 = vunpack.c.h.b16 %v113
    %v269 = vunpack.c.l.b16 %v114
    %v270 = vunpack.c.h.b16 %v114
    %v271 = vunpack.c.l.b16 %v115
    %v272 = vunpack.c.h.b16 %v115
    %v273 = vunpack.c.l.b16 %v116
    %v274 = vunpack.c.h.b16 %v116
    %v275 = vunpack.c.l.b16 %v117
    %v276 = vunpack.c.h.b16 %v117
    %v277 = vpack.c.b16 %v227, %v225
    %v278 = vpack.c.b16 %v228, %v226
    %v279 = vpack.c.b16 %v231, %v229
    %v280 = vpack.c.b16 %v232, %v230
    %v281 = vpack.c.b16 %v235, %v233
    %v282 = vpack.c.b16 %v236, %v234
    %v283 = vpack.c.b16 %v239, %v237
    %v284 = vpack.c.b16 %v240, %v238
    %v285 = vpack.c.b16 %v243, %v241
    %v286 = vpack.c.b16 %v244, %v242
    %v287 = vpack.c.b16 %v247, %v245
    %v288 = vpack.c.b16 %v248, %v246
    %v289 = vpack.c.b16 %v251, %v249
    %v290 = vpack.c.b16 %v252, %v250
    %v291 = vpack.c.b16 %v255, %v253
    %v292 = vpack.c.b16 %v256, %v254
    %v293 = vpack.c.b16 %v259, %v257
    %v294 = vpack.c.b16 %v260, %v258
    %v295 = vpack.c.b16 %v263, %v261
    %v296 = vpack.c.b16 %v264, %v262
    %v297 = vpack.c.b16 %v267, %v265
    %v298 = vpack.c.b16 %v268, %v266
    %v299 = vpack.c.b16 %v271, %v269
    %v300 = vpack.c.b16 %v272, %v270
    %v301 = vpack.c.b16 %v275, %v273
    %v302 = vpack.c.b16 %v276, %v274
    %vm327 = vcmask 613376
    %v329 = vsel %vm327, %v176, 0
    %v332 = vsel %vm327, %v178, 0
    %v335 = vsel %vm327, %v180, 0
    %v338 = vsel %vm327, %v182, 0
    %v341 = vsel %vm327, %v184, 0
    %v344 = vsel %vm327, %v186, 0
    %v347 = vsel %vm327, %v188, 0
    %v350 = vsel %vm327, %v190, 0
    %vm352 = vcmask 1044480
    %vm353 = vcmask 1045504
    %v354 = vsel %vm352, 4294967295, 65535
    %v355 = vsel %vm353, %v354, 0
    %v357 = vand.u32 %v301, %v355
    %v360 = vand.u32 %v302, %v355
    %362 = vmatprep.subr.bf16.mxu0 %v278
    %363 = vmatpush1.bf16.msra.mxu0 %v277
    %364 = vmatprep.subr.bf16.mxu0 %v280
    %365 = vmatpush1.bf16.msra.mxu0 %v279
    %366 = vmatprep.subr.bf16.mxu0 %v282
    %367 = vmatpush1.bf16.msra.mxu0 %v281
    %368 = vmatprep.subr.bf16.mxu0 %v284
    %369 = vmatpush1.bf16.msra.mxu0 %v283
    %370 = vmatprep.subr.bf16.mxu0 %v286
    %371 = vmatpush1.bf16.msra.mxu0 %v285
    %372 = vmatprep.subr.bf16.mxu0 %v288
    %373 = vmatpush1.bf16.msra.mxu0 %v287
    %374 = vmatprep.subr.bf16.mxu0 %v290
    %375 = vmatpush1.bf16.msra.mxu0 %v289
    %376 = vmatprep.subr.bf16.mxu0 %v292
    %377 = vmatpush1.bf16.msra.mxu0 %v291
    %378 = vmatprep.subr.bf16.mxu0 %v294
    %379 = vmatpush1.bf16.msra.mxu0 %v293
    %380 = vmatprep.subr.bf16.mxu0 %v296
    %381 = vmatpush1.bf16.msra.mxu0 %v295
    %382 = vmatprep.subr.bf16.mxu0 %v298
    %383 = vmatpush1.bf16.msra.mxu0 %v297
    %384 = vmatprep.subr.bf16.mxu0 %v300
    %385 = vmatpush1.bf16.msra.mxu0 %v299
    %386 = vmatprep.subr.bf16.mxu0 %v360
    %387 = vmatpush1.bf16.msra.mxu0 %v357
    %388 = vmatprep.subr.bf16.mxu0 0
    %389 = vmatpush1.bf16.msra.mxu0 0
    %390 = vmatprep.subr.bf16.mxu0 0
    %391 = vmatpush1.bf16.msra.mxu0 0
    %392 = vmatprep.subr.bf16.mxu0 0
    %393 = vmatpush1.bf16.msra.mxu0 0
    %394 = vmatprep.mubr.bf16.mxu0 %v329
    %395 = vmatmul.mubr.bf16.gmra.mrb[0].mxu0 %v175
    %v396 = vpop.f32.mrb[0].mxu0
    %v397 = vadd.f32 %v123, %v396
    %v398 = vpop.f32.mrb[0].mxu0
    %v399 = vadd.f32 %v127, %v398
    %v400 = vpop.f32.mrb[0].mxu0
    %v401 = vadd.f32 %v123, %v400
    %v402 = vpop.f32.mrb[0].mxu0
    %v403 = vadd.f32 %v127, %v402
    %404 = vmatprep.mubr.bf16.mxu0 %v332
    %405 = vmatmul.mubr.bf16.gmra.mrb[0].mxu0 %v177
    %v406 = vpop.f32.mrb[0].mxu0
    %v407 = vadd.f32 %v123, %v406
    %v408 = vpop.f32.mrb[0].mxu0
    %v409 = vadd.f32 %v127, %v408
    %v410 = vpop.f32.mrb[0].mxu0
    %v411 = vadd.f32 %v123, %v410
    %v412 = vpop.f32.mrb[0].mxu0
    %v413 = vadd.f32 %v127, %v412
    %414 = vmatprep.mubr.bf16.mxu0 %v335
    %415 = vmatmul.mubr.bf16.gmra.mrb[0].mxu0 %v179
    %v416 = vpop.f32.mrb[0].mxu0
    %v417 = vadd.f32 %v123, %v416
    %v418 = vpop.f32.mrb[0].mxu0
    %v419 = vadd.f32 %v127, %v418
    %v420 = vpop.f32.mrb[0].mxu0
    %v421 = vadd.f32 %v123, %v420
    %v422 = vpop.f32.mrb[0].mxu0
    %v423 = vadd.f32 %v127, %v422
    %424 = vmatprep.mubr.bf16.mxu0 %v338
    %425 = vmatmul.mubr.bf16.gmra.mrb[0].mxu0 %v181
    %v426 = vpop.f32.mrb[0].mxu0
    %v427 = vadd.f32 %v123, %v426
    %v428 = vpop.f32.mrb[0].mxu0
    %v429 = vadd.f32 %v127, %v428
    %v430 = vpop.f32.mrb[0].mxu0
    %v431 = vadd.f32 %v123, %v430
    %v432 = vpop.f32.mrb[0].mxu0
    %v433 = vadd.f32 %v127, %v432
    %434 = vmatprep.mubr.bf16.mxu0 %v341
    %435 = vmatmul.mubr.bf16.gmra.mrb[0].mxu0 %v183
    %v436 = vpop.f32.mrb[0].mxu0
    %v437 = vadd.f32 %v123, %v436
    %v438 = vpop.f32.mrb[0].mxu0
    %v439 = vadd.f32 %v127, %v438
    %v440 = vpop.f32.mrb[0].mxu0
    %v441 = vadd.f32 %v123, %v440
    %v442 = vpop.f32.mrb[0].mxu0
    %v443 = vadd.f32 %v127, %v442
    %444 = vmatprep.mubr.bf16.mxu0 %v344
    %445 = vmatmul.mubr.bf16.gmra.mrb[0].mxu0 %v185
    %v446 = vpop.f32.mrb[0].mxu0
    %v447 = vadd.f32 %v123, %v446
    %v448 = vpop.f32.mrb[0].mxu0
    %v449 = vadd.f32 %v127, %v448
    %v450 = vpop.f32.mrb[0].mxu0
    %v451 = vadd.f32 %v123, %v450
    %v452 = vpop.f32.mrb[0].mxu0
    %v453 = vadd.f32 %v127, %v452
    %454 = vmatprep.mubr.bf16.mxu0 %v347
    %455 = vmatmul.mubr.bf16.gmra.mrb[0].mxu0 %v187
    %v456 = vpop.f32.mrb[0].mxu0
    %v457 = vadd.f32 %v123, %v456
    %v458 = vpop.f32.mrb[0].mxu0
    %v459 = vadd.f32 %v127, %v458
    %v460 = vpop.f32.mrb[0].mxu0
    %v461 = vadd.f32 %v123, %v460
    %v462 = vpop.f32.mrb[0].mxu0
    %v463 = vadd.f32 %v127, %v462
    %464 = vmatprep.mubr.bf16.mxu0 %v350
    %465 = vmatmul.mubr.bf16.gmra.mrb[0].mxu0 %v189
    %v466 = vpop.f32.mrb[0].mxu0
    %v467 = vadd.f32 %v123, %v466
    %v468 = vpop.f32.mrb[0].mxu0
    %v469 = vadd.f32 %v127, %v468
    %v470 = vpop.f32.mrb[0].mxu0
    %v471 = vpop.f32.mrb[0].mxu0
    %472 = vdwg.mxu0
    %v473 = vmul.f32 %v397, 0.2
    %v474 = vmul.f32 %v399, 0.2
    %v475 = vmul.f32 %v401, 0.2
    %v476 = vmul.f32 %v403, 0.2
    %v477 = vmul.f32 %v407, 0.2
    %v478 = vmul.f32 %v409, 0.2
    %v479 = vmul.f32 %v411, 0.2
    %v480 = vmul.f32 %v413, 0.2
    %v481 = vmul.f32 %v417, 0.2
    %v482 = vmul.f32 %v419, 0.2
    %v483 = vmul.f32 %v421, 0.2
    %v484 = vmul.f32 %v423, 0.2
    %v485 = vmul.f32 %v427, 0.2
    %v486 = vmul.f32 %v429, 0.2
    %v487 = vmul.f32 %v431, 0.2
    %v488 = vmul.f32 %v433, 0.2
    %v489 = vmul.f32 %v437, 0.2
    %v490 = vmul.f32 %v439, 0.2
    %v491 = vmul.f32 %v441, 0.2
    %v492 = vmul.f32 %v443, 0.2
    %v493 = vmul.f32 %v447, 0.2
    %v494 = vmul.f32 %v449, 0.2
    %v495 = vmul.f32 %v451, 0.2
    %v496 = vmul.f32 %v453, 0.2
    %v497 = vmul.f32 %v457, 0.2
    %v498 = vmul.f32 %v459, 0.2
    %v499 = vmul.f32 %v461, 0.2
    %v500 = vmul.f32 %v463, 0.2
    %v501 = vmul.f32 %v467, 0.2
    %v502 = vmul.f32 %v469, 0.2
    %v503 = vmax.f32 %v397, %v473
    %v504 = vmax.f32 %v399, %v474
    %v505 = vmax.f32 %v401, %v475
    %v506 = vmax.f32 %v403, %v476
    %v507 = vmax.f32 %v407, %v477
    %v508 = vmax.f32 %v409, %v478
    %v509 = vmax.f32 %v411, %v479
    %v510 = vmax.f32 %v413, %v480
    %v511 = vmax.f32 %v417, %v481
    %v512 = vmax.f32 %v419, %v482
    %v513 = vmax.f32 %v421, %v483
    %v514 = vmax.f32 %v423, %v484
    %v515 = vmax.f32 %v427, %v485
    %v516 = vmax.f32 %v429, %v486
    %v517 = vmax.f32 %v431, %v487
    %v518 = vmax.f32 %v433, %v488
    %v519 = vmax.f32 %v437, %v489
    %v520 = vmax.f32 %v439, %v490
    %v521 = vmax.f32 %v441, %v491
    %v522 = vmax.f32 %v443, %v492
    %v523 = vmax.f32 %v447, %v493
    %v524 = vmax.f32 %v449, %v494
    %v525 = vmax.f32 %v451, %v495
    %v526 = vmax.f32 %v453, %v496
    %v527 = vmax.f32 %v457, %v497
    %v528 = vmax.f32 %v459, %v498
    %v529 = vmax.f32 %v461, %v499
    %v530 = vmax.f32 %v463, %v500
    %v531 = vmax.f32 %v467, %v501
    %v532 = vmax.f32 %v469, %v502
    %v533 = vpack.c.bf16 %v505, %v503
    %v534 = vpack.c.bf16 %v506, %v504
    %v535 = vpack.c.bf16 %v509, %v507
    %v536 = vpack.c.bf16 %v510, %v508
    %v537 = vpack.c.bf16 %v513, %v511
    %v538 = vpack.c.bf16 %v514, %v512
    %v539 = vpack.c.bf16 %v517, %v515
    %v540 = vpack.c.bf16 %v518, %v516
    %v541 = vpack.c.bf16 %v521, %v519
    %v542 = vpack.c.bf16 %v522, %v520
    %v543 = vpack.c.bf16 %v525, %v523
    %v544 = vpack.c.bf16 %v526, %v524
    %v545 = vpack.c.bf16 %v529, %v527
    %v546 = vpack.c.bf16 %v530, %v528
    %v547 = vpack.c.bf16 %v531, %v531
    %v548 = vpack.c.bf16 %v532, %v532
    %v549 = vlaneseq
    %v550 = vshrl.u32 %v549, 7
    %v551 = vsub.s32 0, %v550
    %v552 = vrot.slane %v43, %v551
    %v585 = vunpack.c.l.b16 %v45
    %v586 = vunpack.c.l.b16 %v46
    %v587 = vunpack.c.l.b16 %v47
    %v588 = vunpack.c.l.b16 %v48
    %v589 = vunpack.c.l.b16 %v49
    %v590 = vunpack.c.l.b16 %v50
    %v591 = vunpack.c.l.b16 %v51
    %v592 = vunpack.c.l.b16 %v52
    %v593 = vunpack.c.l.b16 %v53
    %v594 = vunpack.c.l.b16 %v54
    %v595 = vunpack.c.l.b16 %v55
    %v596 = vunpack.c.l.b16 %v56
    %v597 = vunpack.c.l.b16 %v57
    %v598 = vunpack.c.l.b16 %v58
    %v599 = vunpack.c.l.b16 %v59
    %v600 = vunpack.c.l.b16 %v60
    %v601 = vunpack.c.l.b16 %v61
    %v602 = vunpack.c.l.b16 %v62
    %v603 = vunpack.c.l.b16 %v63
    %v604 = vunpack.c.l.b16 %v64
    %v605 = vunpack.c.l.b16 %v65
    %v606 = vunpack.c.l.b16 %v66
    %v607 = vunpack.c.l.b16 %v67
    %v608 = vunpack.c.l.b16 %v68
    %v609 = vunpack.c.l.b16 %v69
    %v610 = vunpack.c.l.b16 %v70
    %v611 = vunpack.c.l.b16 %v71
    %v612 = vunpack.c.l.b16 %v72
    %v613 = vunpack.c.l.b16 %v73
    %v614 = vunpack.c.l.b16 %v74
    %v615 = vunpack.c.l.b16 %v75
    %v616 = vunpack.c.l.b16 %v76
    %v617 = vpack.c.b16 %v586, %v585
    %v618 = vpack.c.b16 %v588, %v587
    %v619 = vpack.c.b16 %v590, %v589
    %v620 = vpack.c.b16 %v592, %v591
    %v621 = vpack.c.b16 %v594, %v593
    %v622 = vpack.c.b16 %v596, %v595
    %v623 = vpack.c.b16 %v598, %v597
    %v624 = vpack.c.b16 %v600, %v599
    %v625 = vpack.c.b16 %v602, %v601
    %v626 = vpack.c.b16 %v604, %v603
    %v627 = vpack.c.b16 %v606, %v605
    %v628 = vpack.c.b16 %v608, %v607
    %v629 = vpack.c.b16 %v610, %v609
    %v630 = vpack.c.b16 %v612, %v611
    %v631 = vpack.c.b16 %v614, %v613
    %v632 = vpack.c.b16 %v616, %v615
    %649 = vmatprep.subr.bf16.mxu0 0
    %650 = vmatpush1.bf16.msra.mxu0 %v617
    %651 = vmatprep.subr.bf16.mxu0 0
    %652 = vmatpush1.bf16.msra.mxu0 %v618
    %653 = vmatprep.subr.bf16.mxu0 0
    %654 = vmatpush1.bf16.msra.mxu0 %v619
    %655 = vmatprep.subr.bf16.mxu0 0
    %656 = vmatpush1.bf16.msra.mxu0 %v620
    %657 = vmatprep.subr.bf16.mxu0 0
    %658 = vmatpush1.bf16.msra.mxu0 %v621
    %659 = vmatprep.subr.bf16.mxu0 0
    %660 = vmatpush1.bf16.msra.mxu0 %v622
    %661 = vmatprep.subr.bf16.mxu0 0
    %662 = vmatpush1.bf16.msra.mxu0 %v623
    %663 = vmatprep.subr.bf16.mxu0 0
    %664 = vmatpush1.bf16.msra.mxu0 %v624
    %665 = vmatprep.subr.bf16.mxu0 0
    %666 = vmatpush1.bf16.msra.mxu0 %v625
    %667 = vmatprep.subr.bf16.mxu0 0
    %668 = vmatpush1.bf16.msra.mxu0 %v626
    %669 = vmatprep.subr.bf16.mxu0 0
    %670 = vmatpush1.bf16.msra.mxu0 %v627
    %671 = vmatprep.subr.bf16.mxu0 0
    %672 = vmatpush1.bf16.msra.mxu0 %v628
    %673 = vmatprep.subr.bf16.mxu0 0
    %674 = vmatpush1.bf16.msra.mxu0 %v629
    %675 = vmatprep.subr.bf16.mxu0 0
    %676 = vmatpush1.bf16.msra.mxu0 %v630
    %677 = vmatprep.subr.bf16.mxu0 0
    %678 = vmatpush1.bf16.msra.mxu0 %v631
    %679 = vmatprep.subr.bf16.mxu0 0
    %680 = vmatpush1.bf16.msra.mxu0 %v632
    %681 = vmatprep.mubr.bf16.mxu0 %v534
    %682 = vmatmul.mubr.bf16.gmra.mrb[0].mxu0 %v533
    %v683 = vpop.f32.mrb[0].mxu0
    %v684 = vadd.f32 %v552, %v683
    %v685 = vpop.f32.mrb[0].mxu0
    %v686 = vpop.f32.mrb[0].mxu0
    %v687 = vadd.f32 %v552, %v686
    %v688 = vpop.f32.mrb[0].mxu0
    %689 = vmatprep.mubr.bf16.mxu0 %v536
    %690 = vmatmul.mubr.bf16.gmra.mrb[0].mxu0 %v535
    %v691 = vpop.f32.mrb[0].mxu0
    %v692 = vadd.f32 %v552, %v691
    %v693 = vpop.f32.mrb[0].mxu0
    %v694 = vpop.f32.mrb[0].mxu0
    %v695 = vadd.f32 %v552, %v694
    %v696 = vpop.f32.mrb[0].mxu0
    %697 = vmatprep.mubr.bf16.mxu0 %v538
    %698 = vmatmul.mubr.bf16.gmra.mrb[0].mxu0 %v537
    %v699 = vpop.f32.mrb[0].mxu0
    %v700 = vadd.f32 %v552, %v699
    %v701 = vpop.f32.mrb[0].mxu0
    %v702 = vpop.f32.mrb[0].mxu0
    %v703 = vadd.f32 %v552, %v702
    %v704 = vpop.f32.mrb[0].mxu0
    %705 = vmatprep.mubr.bf16.mxu0 %v540
    %706 = vmatmul.mubr.bf16.gmra.mrb[0].mxu0 %v539
    %v707 = vpop.f32.mrb[0].mxu0
    %v708 = vadd.f32 %v552, %v707
    %v709 = vpop.f32.mrb[0].mxu0
    %v710 = vpop.f32.mrb[0].mxu0
    %v711 = vadd.f32 %v552, %v710
    %v712 = vpop.f32.mrb[0].mxu0
    %713 = vmatprep.mubr.bf16.mxu0 %v542
    %714 = vmatmul.mubr.bf16.gmra.mrb[0].mxu0 %v541
    %v715 = vpop.f32.mrb[0].mxu0
    %v716 = vadd.f32 %v552, %v715
    %v717 = vpop.f32.mrb[0].mxu0
    %v718 = vpop.f32.mrb[0].mxu0
    %v719 = vadd.f32 %v552, %v718
    %v720 = vpop.f32.mrb[0].mxu0
    %721 = vmatprep.mubr.bf16.mxu0 %v544
    %722 = vmatmul.mubr.bf16.gmra.mrb[0].mxu0 %v543
    %v723 = vpop.f32.mrb[0].mxu0
    %v724 = vadd.f32 %v552, %v723
    %v725 = vpop.f32.mrb[0].mxu0
    %v726 = vpop.f32.mrb[0].mxu0
    %v727 = vadd.f32 %v552, %v726
    %v728 = vpop.f32.mrb[0].mxu0
    %729 = vmatprep.mubr.bf16.mxu0 %v546
    %730 = vmatmul.mubr.bf16.gmra.mrb[0].mxu0 %v545
    %v731 = vpop.f32.mrb[0].mxu0
    %v732 = vadd.f32 %v552, %v731
    %v733 = vpop.f32.mrb[0].mxu0
    %v734 = vpop.f32.mrb[0].mxu0
    %v735 = vadd.f32 %v552, %v734
    %v736 = vpop.f32.mrb[0].mxu0
    %737 = vmatprep.mubr.bf16.mxu0 %v548
    %738 = vmatmul.mubr.bf16.gmra.mrb[0].mxu0 %v547
    %v739 = vpop.f32.mrb[0].mxu0
    %v740 = vadd.f32 %v552, %v739
    %v741 = vpop.f32.mrb[0].mxu0
    %v742 = vpop.f32.mrb[0].mxu0
    %v743 = vpop.f32.mrb[0].mxu0
    %744 = vdwg.mxu0
    %v745 = vmul.f32 %v684, 0.2
    %v746 = vmul.f32 %v687, 0.2
    %v747 = vmul.f32 %v692, 0.2
    %v748 = vmul.f32 %v695, 0.2
    %v749 = vmul.f32 %v700, 0.2
    %v750 = vmul.f32 %v703, 0.2
    %v751 = vmul.f32 %v708, 0.2
    %v752 = vmul.f32 %v711, 0.2
    %v753 = vmul.f32 %v716, 0.2
    %v754 = vmul.f32 %v719, 0.2
    %v755 = vmul.f32 %v724, 0.2
    %v756 = vmul.f32 %v727, 0.2
    %v757 = vmul.f32 %v732, 0.2
    %v758 = vmul.f32 %v735, 0.2
    %v759 = vmul.f32 %v740, 0.2
    %v760 = vmax.f32 %v684, %v745
    %v761 = vmax.f32 %v687, %v746
    %v762 = vmax.f32 %v692, %v747
    %v763 = vmax.f32 %v695, %v748
    %v764 = vmax.f32 %v700, %v749
    %v765 = vmax.f32 %v703, %v750
    %v766 = vmax.f32 %v708, %v751
    %v767 = vmax.f32 %v711, %v752
    %v768 = vmax.f32 %v716, %v753
    %v769 = vmax.f32 %v719, %v754
    %v770 = vmax.f32 %v724, %v755
    %v771 = vmax.f32 %v727, %v756
    %v772 = vmax.f32 %v732, %v757
    %v773 = vmax.f32 %v735, %v758
    %v774 = vmax.f32 %v740, %v759
    %s775 = sld [smem:[#allocation2]]
    %v776 = vstv %s775
    %v777 = vmul.f32 %v760, %v776
    %s778 = sld [smem:[#allocation2 + $0x1]]
    %v779 = vstv %s778
    %v780 = vmul.f32 %v761, %v779
    %s781 = sld [smem:[#allocation2 + $0x2]]
    %v782 = vstv %s781
    %v783 = vmul.f32 %v762, %v782
    %s784 = sld [smem:[#allocation2 + $0x3]]
    %v785 = vstv %s784
    %v786 = vmul.f32 %v763, %v785
    %s787 = sld [smem:[#allocation2 + $0x4]]
    %v788 = vstv %s787
    %v789 = vmul.f32 %v764, %v788
    %s790 = sld [smem:[#allocation2 + $0x5]]
    %v791 = vstv %s790
    %v792 = vmul.f32 %v765, %v791
    %s793 = sld [smem:[#allocation2 + $0x6]]
    %v794 = vstv %s793
    %v795 = vmul.f32 %v766, %v794
    %s796 = sld [smem:[#allocation2 + $0x7]]
    %v797 = vstv %s796
    %v798 = vmul.f32 %v767, %v797
    %s799 = sld [smem:[#allocation2 + $0x8]]
    %v800 = vstv %s799
    %v801 = vmul.f32 %v768, %v800
    %s802 = sld [smem:[#allocation2 + $0x9]]
    %v803 = vstv %s802
    %v804 = vmul.f32 %v769, %v803
    %s805 = sld [smem:[#allocation2 + $0xa]]
    %v806 = vstv %s805
    %v807 = vmul.f32 %v770, %v806
    %s808 = sld [smem:[#allocation2 + $0xb]]
    %v809 = vstv %s808
    %v810 = vmul.f32 %v771, %v809
    %s811 = sld [smem:[#allocation2 + $0xc]]
    %v812 = vstv %s811
    %v813 = vmul.f32 %v772, %v812
    %s814 = sld [smem:[#allocation2 + $0xd]]
    %v815 = vstv %s814
    %v816 = vmul.f32 %v773, %v815
    %s817 = sld [smem:[#allocation2 + $0xe]]
    %v818 = vstv %s817
    %v819 = vmul.f32 %v774, %v818
    %v820 = vadd.f32 %v777, %v780
    %v821 = vadd.f32 %v783, %v786
    %v822 = vadd.f32 %v789, %v792
    %v823 = vadd.f32 %v795, %v798
    %v824 = vadd.f32 %v801, %v804
    %v825 = vadd.f32 %v807, %v810
    %v826 = vadd.f32 %v813, %v816
    %v827 = vadd.f32 %v820, %v821
    %v828 = vadd.f32 %v822, %v823
    %v829 = vadd.f32 %v824, %v825
    %v830 = vadd.f32 %v826, %v819
    %v831 = vadd.f32 %v827, %v828
    %v832 = vadd.f32 %v829, %v830
    %v833 = vadd.f32 %v831, %v832
    %v834 = vld [vmem:[%s2] sm:$0xf]
    %v835 = vld [vmem:[%s4] sm:$0xff]
    %v836 = vld [vmem:[%s4 + $0x8] sm:$0xff]
    %v837 = vld [vmem:[%s4 + $0x10] sm:$0xff]
    %v838 = vld [vmem:[%s4 + $0x18] sm:$0xff]
    %v839 = vld [vmem:[%s4 + $0x20] sm:$0xff]
    %v840 = vld [vmem:[%s4 + $0x28] sm:$0xff]
    %v841 = vld [vmem:[%s4 + $0x30] sm:$0xff]
    %v842 = vld [vmem:[%s4 + $0x38] sm:$0xff]
    %v843 = vld [vmem:[%s4 + $0x40] sm:$0xff]
    %v844 = vld [vmem:[%s4 + $0x48] sm:$0xff]
    %v845 = vld [vmem:[%s4 + $0x50] sm:$0xff]
    %v846 = vld [vmem:[%s4 + $0x58] sm:$0xff]
    %v847 = vld [vmem:[%s4 + $0x60] sm:$0x33]
    %s848 = scalar_lea.vmem %s5, 1
    %v849 = vld [vmem:[%s848] ss:$4 sm:$0x3]
    %v851 = vlaneseq
    %v852 = vshrl.u32 %v851, 7
    %v853 = vsub.s32 0, %v852
    %v854 = vrot.slane %v849, %v853
    %v855 = vlaneseq
    %v856 = vshrl.u32 %v855, 7
    %v857 = vsub.s32 1, %v856
    %v858 = vrot.slane %v849, %v857
    %v874 = vunpack.c.l.b16 %v835
    %v875 = vunpack.c.h.b16 %v835
    %v876 = vunpack.c.l.b16 %v836
    %v877 = vunpack.c.h.b16 %v836
    %v878 = vunpack.c.l.b16 %v837
    %v879 = vunpack.c.h.b16 %v837
    %v880 = vunpack.c.l.b16 %v838
    %v881 = vunpack.c.h.b16 %v838
    %v882 = vunpack.c.l.b16 %v839
    %v883 = vunpack.c.h.b16 %v839
    %v884 = vunpack.c.l.b16 %v840
    %v885 = vunpack.c.h.b16 %v840
    %v886 = vunpack.c.l.b16 %v841
    %v887 = vunpack.c.h.b16 %v841
    %v888 = vunpack.c.l.b16 %v842
    %v889 = vunpack.c.h.b16 %v842
    %v890 = vunpack.c.l.b16 %v843
    %v891 = vunpack.c.h.b16 %v843
    %v892 = vunpack.c.l.b16 %v844
    %v893 = vunpack.c.h.b16 %v844
    %v894 = vunpack.c.l.b16 %v845
    %v895 = vunpack.c.h.b16 %v845
    %v896 = vunpack.c.l.b16 %v846
    %v897 = vunpack.c.h.b16 %v846
    %v898 = vunpack.c.l.b16 %v847
    %v899 = vunpack.c.h.b16 %v847
    %v900 = vpack.c.b16 %v876, %v874
    %v901 = vpack.c.b16 %v877, %v875
    %v902 = vpack.c.b16 %v880, %v878
    %v903 = vpack.c.b16 %v881, %v879
    %v904 = vpack.c.b16 %v884, %v882
    %v905 = vpack.c.b16 %v885, %v883
    %v906 = vpack.c.b16 %v888, %v886
    %v907 = vpack.c.b16 %v889, %v887
    %v908 = vpack.c.b16 %v892, %v890
    %v909 = vpack.c.b16 %v893, %v891
    %v910 = vpack.c.b16 %v896, %v894
    %v911 = vpack.c.b16 %v897, %v895
    %v912 = vpack.c.b16 %v898, %v898
    %v913 = vpack.c.b16 %v899, %v899
    %vm926 = vcmask 818176
    %v928 = vsel %vm926, %v834, 0
    %vm930 = vcmask 1041408
    %v932 = vsel %vm930, %v912, 0
    %v935 = vsel %vm930, %v913, 0
    %937 = vmatprep.subr.bf16.mxu0 %v901
    %938 = vmatpush1.bf16.msra.mxu0 %v900
    %939 = vmatprep.subr.bf16.mxu0 %v903
    %940 = vmatpush1.bf16.msra.mxu0 %v902
    %941 = vmatprep.subr.bf16.mxu0 %v905
    %942 = vmatpush1.bf16.msra.mxu0 %v904
    %943 = vmatprep.subr.bf16.mxu0 %v907
    %944 = vmatpush1.bf16.msra.mxu0 %v906
    %945 = vmatprep.subr.bf16.mxu0 %v909
    %946 = vmatpush1.bf16.msra.mxu0 %v908
    %947 = vmatprep.subr.bf16.mxu0 %v911
    %948 = vmatpush1.bf16.msra.mxu0 %v910
    %949 = vmatprep.subr.bf16.mxu0 %v935
    %950 = vmatpush1.bf16.msra.mxu0 %v932
    %951 = vmatprep.subr.bf16.mxu0 0
    %952 = vmatpush1.bf16.msra.mxu0 0
    %953 = vmatprep.subr.bf16.mxu0 0
    %954 = vmatpush1.bf16.msra.mxu0 0
    %955 = vmatprep.subr.bf16.mxu0 0
    %956 = vmatpush1.bf16.msra.mxu0 0
    %957 = vmatprep.subr.bf16.mxu0 0
    %958 = vmatpush1.bf16.msra.mxu0 0
    %959 = vmatprep.subr.bf16.mxu0 0
    %960 = vmatpush1.bf16.msra.mxu0 0
    %961 = vmatprep.subr.bf16.mxu0 0
    %962 = vmatpush1.bf16.msra.mxu0 0
    %963 = vmatprep.subr.bf16.mxu0 0
    %964 = vmatpush1.bf16.msra.mxu0 0
    %965 = vmatprep.subr.bf16.mxu0 0
    %966 = vmatpush1.bf16.msra.mxu0 0
    %967 = vmatprep.subr.bf16.mxu0 0
    %968 = vmatpush1.bf16.msra.mxu0 0
    %969 = vmatprep.mubr.bf16.mxu0 0
    %970 = vmatmul.mubr.bf16.gmra.mrb[0].mxu0 %v928
    %v971 = vpop.f32.mrb[0].mxu0
    %v972 = vadd.f32 %v854, %v971
    %v973 = vpop.f32.mrb[0].mxu0
    %v974 = vadd.f32 %v858, %v973
    %v975 = vpop.f32.mrb[0].mxu0
    %v976 = vpop.f32.mrb[0].mxu0
    %977 = vdwg.mxu0
    %v978 = vmul.f32 %v972, 0.2
    %v979 = vmul.f32 %v974, 0.2
    %v980 = vmax.f32 %v972, %v978
    %v981 = vmax.f32 %v974, %v979
    %v982 = vpack.c.bf16 %v980, %v980
    %v983 = vpack.c.bf16 %v981, %v981
    %984 = vmatprep.subr.bf16.mxu0 0
    %985 = vmatpush1.bf16.msra.mxu0 %v617
    %986 = vmatprep.subr.bf16.mxu0 0
    %987 = vmatpush1.bf16.msra.mxu0 %v618
    %988 = vmatprep.subr.bf16.mxu0 0
    %989 = vmatpush1.bf16.msra.mxu0 %v619
    %990 = vmatprep.subr.bf16.mxu0 0
    %991 = vmatpush1.bf16.msra.mxu0 %v620
    %992 = vmatprep.subr.bf16.mxu0 0
    %993 = vmatpush1.bf16.msra.mxu0 %v621
    %994 = vmatprep.subr.bf16.mxu0 0
    %995 = vmatpush1.bf16.msra.mxu0 %v622
    %996 = vmatprep.subr.bf16.mxu0 0
    %997 = vmatpush1.bf16.msra.mxu0 %v623
    %998 = vmatprep.subr.bf16.mxu0 0
    %999 = vmatpush1.bf16.msra.mxu0 %v624
    %1000 = vmatprep.subr.bf16.mxu0 0
    %1001 = vmatpush1.bf16.msra.mxu0 %v625
    %1002 = vmatprep.subr.bf16.mxu0 0
    %1003 = vmatpush1.bf16.msra.mxu0 %v626
    %1004 = vmatprep.subr.bf16.mxu0 0
    %1005 = vmatpush1.bf16.msra.mxu0 %v627
    %1006 = vmatprep.subr.bf16.mxu0 0
    %1007 = vmatpush1.bf16.msra.mxu0 %v628
    %1008 = vmatprep.subr.bf16.mxu0 0
    %1009 = vmatpush1.bf16.msra.mxu0 %v629
    %1010 = vmatprep.subr.bf16.mxu0 0
    %1011 = vmatpush1.bf16.msra.mxu0 %v630
    %1012 = vmatprep.subr.bf16.mxu0 0
    %1013 = vmatpush1.bf16.msra.mxu0 %v631
    %1014 = vmatprep.subr.bf16.mxu0 0
    %1015 = vmatpush1.bf16.msra.mxu0 %v632
    %1016 = vmatprep.mubr.bf16.mxu0 %v983
    %1017 = vmatmul.mubr.bf16.gmra.mrb[0].mxu0 %v982
    %v1018 = vpop.f32.mrb[0].mxu0
    %v1019 = vadd.f32 %v552, %v1018
    %v1020 = vpop.f32.mrb[0].mxu0
    %v1021 = vpop.f32.mrb[0].mxu0
    %v1022 = vpop.f32.mrb[0].mxu0
    %1023 = vdwg.mxu0
    %v1024 = vmul.f32 %v1019, 0.2
    %v1025 = vmax.f32 %v1019, %v1024
    %s1026 = sld [smem:[#allocation2 + $0xf]]
    %v1027 = vstv %s1026
    %v1028 = vmul.f32 %v1025, %v1027
    %v1029 = vadd.f32 %v833, %v1028
    %s1030 = scalar_lea.vmem %s1, 120
    %v1031 = vld [vmem:[%s1030] sm:$0xff]
    %v1032 = vld [vmem:[%s1030 + $0x8] sm:$0xff]
    %v1033 = vld [vmem:[%s1030 + $0x10] sm:$0xff]
    %v1034 = vld [vmem:[%s1030 + $0x18] sm:$0xff]
    %v1035 = vld [vmem:[%s1030 + $0x20] sm:$0xff]
    %v1036 = vld [vmem:[%s1030 + $0x28] sm:$0xff]
    %v1037 = vld [vmem:[%s1030 + $0x30] sm:$0xff]
    %v1038 = vld [vmem:[%s1030 + $0x38] sm:$0xff]
    %v1039 = vld [vmem:[%s1030 + $0x40] sm:$0xff]
    %v1040 = vld [vmem:[%s1030 + $0x48] sm:$0xff]
    %v1041 = vld [vmem:[%s1030 + $0x50] sm:$0xff]
    %v1042 = vld [vmem:[%s1030 + $0x58] sm:$0xff]
    %v1043 = vld [vmem:[%s1030 + $0x60] sm:$0xff]
    %v1044 = vld [vmem:[%s1030 + $0x68] sm:$0xff]
    %v1045 = vld [vmem:[%s1030 + $0x70] sm:$0xff]
    %s1046 = scalar_lea.vmem %s3, 208
    %v1047 = vld [vmem:[%s1046] sm:$0xff]
    %v1048 = vld [vmem:[%s1046 + $0x8] sm:$0xff]
    %v1049 = vld [vmem:[%s1046 + $0x10] sm:$0xff]
    %v1050 = vld [vmem:[%s1046 + $0x18] sm:$0xff]
    %v1051 = vld [vmem:[%s1046 + $0x20] sm:$0xff]
    %v1052 = vld [vmem:[%s1046 + $0x28] sm:$0xff]
    %v1053 = vld [vmem:[%s1046 + $0x30] sm:$0xff]
    %v1054 = vld [vmem:[%s1046 + $0x38] sm:$0xff]
    %v1055 = vld [vmem:[%s1046 + $0x40] sm:$0xff]
    %v1056 = vld [vmem:[%s1046 + $0x48] sm:$0xff]
    %v1057 = vld [vmem:[%s1046 + $0x50] sm:$0xff]
    %v1058 = vld [vmem:[%s1046 + $0x58] sm:$0xff]
    %v1059 = vld [vmem:[%s1046 + $0x60] sm:$0xff]
    %v1060 = vld [vmem:[%s1046 + $0x68] sm:$0xff]
    %v1061 = vld [vmem:[%s1046 + $0x70] sm:$0xff]
    %v1062 = vld [vmem:[%s1046 + $0x78] sm:$0xff]
    %v1063 = vld [vmem:[%s1046 + $0x80] sm:$0xff]
    %v1064 = vld [vmem:[%s1046 + $0x88] sm:$0xff]
    %v1065 = vld [vmem:[%s1046 + $0x90] sm:$0xff]
    %v1066 = vld [vmem:[%s1046 + $0x98] sm:$0xff]
    %v1067 = vld [vmem:[%s1046 + $0xa0] sm:$0xff]
    %v1068 = vld [vmem:[%s1046 + $0xa8] sm:$0xff]
    %v1069 = vld [vmem:[%s1046 + $0xb0] sm:$0xff]
    %v1070 = vld [vmem:[%s1046 + $0xb8] sm:$0xff]
    %v1071 = vld [vmem:[%s1046 + $0xc0] sm:$0xff]
    %v1072 = vld [vmem:[%s1046 + $0xc8] sm:$0x33]
    %s1073 = scalar_lea.vmem %s5, 2
    %v1074 = vld [vmem:[%s1073] ss:$4 sm:$0x3]
    %v1076 = vlaneseq
    %v1077 = vshrl.u32 %v1076, 7
    %v1078 = vsub.s32 0, %v1077
    %v1079 = vrot.slane %v1074, %v1078
    %v1080 = vlaneseq
    %v1081 = vshrl.u32 %v1080, 7
    %v1082 = vsub.s32 1, %v1081
    %v1083 = vrot.slane %v1074, %v1082
    %v1101 = vunpack.c.l.b16 %v1031
    %v1102 = vunpack.c.h.b16 %v1031
    %v1103 = vunpack.c.l.b16 %v1032
    %v1104 = vunpack.c.h.b16 %v1032
    %v1105 = vunpack.c.l.b16 %v1033
    %v1106 = vunpack.c.h.b16 %v1033
    %v1107 = vunpack.c.l.b16 %v1034
    %v1108 = vunpack.c.h.b16 %v1034
    %v1109 = vunpack.c.l.b16 %v1035
    %v1110 = vunpack.c.h.b16 %v1035
    %v1111 = vunpack.c.l.b16 %v1036
    %v1112 = vunpack.c.h.b16 %v1036
    %v1113 = vunpack.c.l.b16 %v1037
    %v1114 = vunpack.c.h.b16 %v1037
    %v1115 = vunpack.c.l.b16 %v1038
    %v1116 = vunpack.c.h.b16 %v1038
    %v1117 = vunpack.c.l.b16 %v1039
    %v1118 = vunpack.c.h.b16 %v1039
    %v1119 = vunpack.c.l.b16 %v1040
    %v1120 = vunpack.c.h.b16 %v1040
    %v1121 = vunpack.c.l.b16 %v1041
    %v1122 = vunpack.c.h.b16 %v1041
    %v1123 = vunpack.c.l.b16 %v1042
    %v1124 = vunpack.c.h.b16 %v1042
    %v1125 = vunpack.c.l.b16 %v1043
    %v1126 = vunpack.c.h.b16 %v1043
    %v1127 = vunpack.c.l.b16 %v1044
    %v1128 = vunpack.c.h.b16 %v1044
    %v1129 = vunpack.c.l.b16 %v1045
    %v1130 = vunpack.c.h.b16 %v1045
    %v1131 = vpack.c.b16 %v1103, %v1101
    %v1132 = vpack.c.b16 %v1104, %v1102
    %v1133 = vpack.c.b16 %v1107, %v1105
    %v1134 = vpack.c.b16 %v1108, %v1106
    %v1135 = vpack.c.b16 %v1111, %v1109
    %v1136 = vpack.c.b16 %v1112, %v1110
    %v1137 = vpack.c.b16 %v1115, %v1113
    %v1138 = vpack.c.b16 %v1116, %v1114
    %v1139 = vpack.c.b16 %v1119, %v1117
    %v1140 = vpack.c.b16 %v1120, %v1118
    %v1141 = vpack.c.b16 %v1123, %v1121
    %v1142 = vpack.c.b16 %v1124, %v1122
    %v1143 = vpack.c.b16 %v1127, %v1125
    %v1144 = vpack.c.b16 %v1128, %v1126
    %v1145 = vpack.c.b16 %v1129, %v1129
    %v1146 = vpack.c.b16 %v1130, %v1130
    %v1181 = vunpack.c.l.b16 %v1047
    %v1182 = vunpack.c.h.b16 %v1047
    %v1183 = vunpack.c.l.b16 %v1048
    %v1184 = vunpack.c.h.b16 %v1048
    %v1185 = vunpack.c.l.b16 %v1049
    %v1186 = vunpack.c.h.b16 %v1049
    %v1187 = vunpack.c.l.b16 %v1050
    %v1188 = vunpack.c.h.b16 %v1050
    %v1189 = vunpack.c.l.b16 %v1051
    %v1190 = vunpack.c.h.b16 %v1051
    %v1191 = vunpack.c.l.b16 %v1052
    %v1192 = vunpack.c.h.b16 %v1052
    %v1193 = vunpack.c.l.b16 %v1053
    %v1194 = vunpack.c.h.b16 %v1053
    %v1195 = vunpack.c.l.b16 %v1054
    %v1196 = vunpack.c.h.b16 %v1054
    %v1197 = vunpack.c.l.b16 %v1055
    %v1198 = vunpack.c.h.b16 %v1055
    %v1199 = vunpack.c.l.b16 %v1056
    %v1200 = vunpack.c.h.b16 %v1056
    %v1201 = vunpack.c.l.b16 %v1057
    %v1202 = vunpack.c.h.b16 %v1057
    %v1203 = vunpack.c.l.b16 %v1058
    %v1204 = vunpack.c.h.b16 %v1058
    %v1205 = vunpack.c.l.b16 %v1059
    %v1206 = vunpack.c.h.b16 %v1059
    %v1207 = vunpack.c.l.b16 %v1060
    %v1208 = vunpack.c.h.b16 %v1060
    %v1209 = vunpack.c.l.b16 %v1061
    %v1210 = vunpack.c.h.b16 %v1061
    %v1211 = vunpack.c.l.b16 %v1062
    %v1212 = vunpack.c.h.b16 %v1062
    %v1213 = vunpack.c.l.b16 %v1063
    %v1214 = vunpack.c.h.b16 %v1063
    %v1215 = vunpack.c.l.b16 %v1064
    %v1216 = vunpack.c.h.b16 %v1064
    %v1217 = vunpack.c.l.b16 %v1065
    %v1218 = vunpack.c.h.b16 %v1065
    %v1219 = vunpack.c.l.b16 %v1066
    %v1220 = vunpack.c.h.b16 %v1066
    %v1221 = vunpack.c.l.b16 %v1067
    %v1222 = vunpack.c.h.b16 %v1067
    %v1223 = vunpack.c.l.b16 %v1068
    %v1224 = vunpack.c.h.b16 %v1068
    %v1225 = vunpack.c.l.b16 %v1069
    %v1226 = vunpack.c.h.b16 %v1069
    %v1227 = vunpack.c.l.b16 %v1070
    %v1228 = vunpack.c.h.b16 %v1070
    %v1229 = vunpack.c.l.b16 %v1071
    %v1230 = vunpack.c.h.b16 %v1071
    %v1231 = vunpack.c.l.b16 %v1072
    %v1232 = vunpack.c.h.b16 %v1072
    %v1233 = vpack.c.b16 %v1183, %v1181
    %v1234 = vpack.c.b16 %v1184, %v1182
    %v1235 = vpack.c.b16 %v1187, %v1185
    %v1236 = vpack.c.b16 %v1188, %v1186
    %v1237 = vpack.c.b16 %v1191, %v1189
    %v1238 = vpack.c.b16 %v1192, %v1190
    %v1239 = vpack.c.b16 %v1195, %v1193
    %v1240 = vpack.c.b16 %v1196, %v1194
    %v1241 = vpack.c.b16 %v1199, %v1197
    %v1242 = vpack.c.b16 %v1200, %v1198
    %v1243 = vpack.c.b16 %v1203, %v1201
    %v1244 = vpack.c.b16 %v1204, %v1202
    %v1245 = vpack.c.b16 %v1207, %v1205
    %v1246 = vpack.c.b16 %v1208, %v1206
    %v1247 = vpack.c.b16 %v1211, %v1209
    %v1248 = vpack.c.b16 %v1212, %v1210
    %v1249 = vpack.c.b16 %v1215, %v1213
    %v1250 = vpack.c.b16 %v1216, %v1214
    %v1251 = vpack.c.b16 %v1219, %v1217
    %v1252 = vpack.c.b16 %v1220, %v1218
    %v1253 = vpack.c.b16 %v1223, %v1221
    %v1254 = vpack.c.b16 %v1224, %v1222
    %v1255 = vpack.c.b16 %v1227, %v1225
    %v1256 = vpack.c.b16 %v1228, %v1226
    %v1257 = vpack.c.b16 %v1231, %v1229
    %v1258 = vpack.c.b16 %v1232, %v1230
    %v1284 = vsel %vm327, %v1132, 0
    %v1287 = vsel %vm327, %v1134, 0
    %v1290 = vsel %vm327, %v1136, 0
    %v1293 = vsel %vm327, %v1138, 0
    %v1296 = vsel %vm327, %v1140, 0
    %v1299 = vsel %vm327, %v1142, 0
    %v1302 = vsel %vm327, %v1144, 0
    %v1305 = vsel %vm327, %v1146, 0
    %v1308 = vand.u32 %v1257, %v355
    %v1311 = vand.u32 %v1258, %v355
    %1313 = vmatprep.subr.bf16.mxu0 %v1234
    %1314 = vmatpush1.bf16.msra.mxu0 %v1233
    %1315 = vmatprep.subr.bf16.mxu0 %v1236
    %1316 = vmatpush1.bf16.msra.mxu0 %v1235
    %1317 = vmatprep.subr.bf16.mxu0 %v1238
    %1318 = vmatpush1.bf16.msra.mxu0 %v1237
    %1319 = vmatprep.subr.bf16.mxu0 %v1240
    %1320 = vmatpush1.bf16.msra.mxu0 %v1239
    %1321 = vmatprep.subr.bf16.mxu0 %v1242
    %1322 = vmatpush1.bf16.msra.mxu0 %v1241
    %1323 = vmatprep.subr.bf16.mxu0 %v1244
    %1324 = vmatpush1.bf16.msra.mxu0 %v1243
    %1325 = vmatprep.subr.bf16.mxu0 %v1246
    %1326 = vmatpush1.bf16.msra.mxu0 %v1245
    %1327 = vmatprep.subr.bf16.mxu0 %v1248
    %1328 = vmatpush1.bf16.msra.mxu0 %v1247
    %1329 = vmatprep.subr.bf16.mxu0 %v1250
    %1330 = vmatpush1.bf16.msra.mxu0 %v1249
    %1331 = vmatprep.subr.bf16.mxu0 %v1252
    %1332 = vmatpush1.bf16.msra.mxu0 %v1251
    %1333 = vmatprep.subr.bf16.mxu0 %v1254
    %1334 = vmatpush1.bf16.msra.mxu0 %v1253
    %1335 = vmatprep.subr.bf16.mxu0 %v1256
    %1336 = vmatpush1.bf16.msra.mxu0 %v1255
    %1337 = vmatprep.subr.bf16.mxu0 %v1311
    %1338 = vmatpush1.bf16.msra.mxu0 %v1308
    %1339 = vmatprep.subr.bf16.mxu0 0
    %1340 = vmatpush1.bf16.msra.mxu0 0
    %1341 = vmatprep.subr.bf16.mxu0 0
    %1342 = vmatpush1.bf16.msra.mxu0 0
    %1343 = vmatprep.subr.bf16.mxu0 0
    %1344 = vmatpush1.bf16.msra.mxu0 0
    %1345 = vmatprep.mubr.bf16.mxu0 %v1284
    %1346 = vmatmul.mubr.bf16.gmra.mrb[0].mxu0 %v1131
    %v1347 = vpop.f32.mrb[0].mxu0
    %v1348 = vadd.f32 %v1079, %v1347
    %v1349 = vpop.f32.mrb[0].mxu0
    %v1350 = vadd.f32 %v1083, %v1349
    %v1351 = vpop.f32.mrb[0].mxu0
    %v1352 = vadd.f32 %v1079, %v1351
    %v1353 = vpop.f32.mrb[0].mxu0
    %v1354 = vadd.f32 %v1083, %v1353
    %1355 = vmatprep.mubr.bf16.mxu0 %v1287
    %1356 = vmatmul.mubr.bf16.gmra.mrb[0].mxu0 %v1133
    %v1357 = vpop.f32.mrb[0].mxu0
    %v1358 = vadd.f32 %v1079, %v1357
    %v1359 = vpop.f32.mrb[0].mxu0
    %v1360 = vadd.f32 %v1083, %v1359
    %v1361 = vpop.f32.mrb[0].mxu0
    %v1362 = vadd.f32 %v1079, %v1361
    %v1363 = vpop.f32.mrb[0].mxu0
    %v1364 = vadd.f32 %v1083, %v1363
    %1365 = vmatprep.mubr.bf16.mxu0 %v1290
    %1366 = vmatmul.mubr.bf16.gmra.mrb[0].mxu0 %v1135
    %v1367 = vpop.f32.mrb[0].mxu0
    %v1368 = vadd.f32 %v1079, %v1367
    %v1369 = vpop.f32.mrb[0].mxu0
    %v1370 = vadd.f32 %v1083, %v1369
    %v1371 = vpop.f32.mrb[0].mxu0
    %v1372 = vadd.f32 %v1079, %v1371
    %v1373 = vpop.f32.mrb[0].mxu0
    %v1374 = vadd.f32 %v1083, %v1373
    %1375 = vmatprep.mubr.bf16.mxu0 %v1293
    %1376 = vmatmul.mubr.bf16.gmra.mrb[0].mxu0 %v1137
    %v1377 = vpop.f32.mrb[0].mxu0
    %v1378 = vadd.f32 %v1079, %v1377
    %v1379 = vpop.f32.mrb[0].mxu0
    %v1380 = vadd.f32 %v1083, %v1379
    %v1381 = vpop.f32.mrb[0].mxu0
    %v1382 = vadd.f32 %v1079, %v1381
    %v1383 = vpop.f32.mrb[0].mxu0
    %v1384 = vadd.f32 %v1083, %v1383
    %1385 = vmatprep.mubr.bf16.mxu0 %v1296
    %1386 = vmatmul.mubr.bf16.gmra.mrb[0].mxu0 %v1139
    %v1387 = vpop.f32.mrb[0].mxu0
    %v1388 = vadd.f32 %v1079, %v1387
    %v1389 = vpop.f32.mrb[0].mxu0
    %v1390 = vadd.f32 %v1083, %v1389
    %v1391 = vpop.f32.mrb[0].mxu0
    %v1392 = vadd.f32 %v1079, %v1391
    %v1393 = vpop.f32.mrb[0].mxu0
    %v1394 = vadd.f32 %v1083, %v1393
    %1395 = vmatprep.mubr.bf16.mxu0 %v1299
    %1396 = vmatmul.mubr.bf16.gmra.mrb[0].mxu0 %v1141
    %v1397 = vpop.f32.mrb[0].mxu0
    %v1398 = vadd.f32 %v1079, %v1397
    %v1399 = vpop.f32.mrb[0].mxu0
    %v1400 = vadd.f32 %v1083, %v1399
    %v1401 = vpop.f32.mrb[0].mxu0
    %v1402 = vadd.f32 %v1079, %v1401
    %v1403 = vpop.f32.mrb[0].mxu0
    %v1404 = vadd.f32 %v1083, %v1403
    %1405 = vmatprep.mubr.bf16.mxu0 %v1302
    %1406 = vmatmul.mubr.bf16.gmra.mrb[0].mxu0 %v1143
    %v1407 = vpop.f32.mrb[0].mxu0
    %v1408 = vadd.f32 %v1079, %v1407
    %v1409 = vpop.f32.mrb[0].mxu0
    %v1410 = vadd.f32 %v1083, %v1409
    %v1411 = vpop.f32.mrb[0].mxu0
    %v1412 = vadd.f32 %v1079, %v1411
    %v1413 = vpop.f32.mrb[0].mxu0
    %v1414 = vadd.f32 %v1083, %v1413
    %1415 = vmatprep.mubr.bf16.mxu0 %v1305
    %1416 = vmatmul.mubr.bf16.gmra.mrb[0].mxu0 %v1145
    %v1417 = vpop.f32.mrb[0].mxu0
    %v1418 = vadd.f32 %v1079, %v1417
    %v1419 = vpop.f32.mrb[0].mxu0
    %v1420 = vadd.f32 %v1083, %v1419
    %v1421 = vpop.f32.mrb[0].mxu0
    %v1422 = vpop.f32.mrb[0].mxu0
    %1423 = vdwg.mxu0
    %v1424 = vmul.f32 %v1348, 0.2
    %v1425 = vmul.f32 %v1350, 0.2
    %v1426 = vmul.f32 %v1352, 0.2
    %v1427 = vmul.f32 %v1354, 0.2
    %v1428 = vmul.f32 %v1358, 0.2
    %v1429 = vmul.f32 %v1360, 0.2
    %v1430 = vmul.f32 %v1362, 0.2
    %v1431 = vmul.f32 %v1364, 0.2
    %v1432 = vmul.f32 %v1368, 0.2
    %v1433 = vmul.f32 %v1370, 0.2
    %v1434 = vmul.f32 %v1372, 0.2
    %v1435 = vmul.f32 %v1374, 0.2
    %v1436 = vmul.f32 %v1378, 0.2
    %v1437 = vmul.f32 %v1380, 0.2
    %v1438 = vmul.f32 %v1382, 0.2
    %v1439 = vmul.f32 %v1384, 0.2
    %v1440 = vmul.f32 %v1388, 0.2
    %v1441 = vmul.f32 %v1390, 0.2
    %v1442 = vmul.f32 %v1392, 0.2
    %v1443 = vmul.f32 %v1394, 0.2
    %v1444 = vmul.f32 %v1398, 0.2
    %v1445 = vmul.f32 %v1400, 0.2
    %v1446 = vmul.f32 %v1402, 0.2
    %v1447 = vmul.f32 %v1404, 0.2
    %v1448 = vmul.f32 %v1408, 0.2
    %v1449 = vmul.f32 %v1410, 0.2
    %v1450 = vmul.f32 %v1412, 0.2
    %v1451 = vmul.f32 %v1414, 0.2
    %v1452 = vmul.f32 %v1418, 0.2
    %v1453 = vmul.f32 %v1420, 0.2
    %v1454 = vmax.f32 %v1348, %v1424
    %v1455 = vmax.f32 %v1350, %v1425
    %v1456 = vmax.f32 %v1352, %v1426
    %v1457 = vmax.f32 %v1354, %v1427
    %v1458 = vmax.f32 %v1358, %v1428
    %v1459 = vmax.f32 %v1360, %v1429
    %v1460 = vmax.f32 %v1362, %v1430
    %v1461 = vmax.f32 %v1364, %v1431
    %v1462 = vmax.f32 %v1368, %v1432
    %v1463 = vmax.f32 %v1370, %v1433
    %v1464 = vmax.f32 %v1372, %v1434
    %v1465 = vmax.f32 %v1374, %v1435
    %v1466 = vmax.f32 %v1378, %v1436
    %v1467 = vmax.f32 %v1380, %v1437
    %v1468 = vmax.f32 %v1382, %v1438
    %v1469 = vmax.f32 %v1384, %v1439
    %v1470 = vmax.f32 %v1388, %v1440
    %v1471 = vmax.f32 %v1390, %v1441
    %v1472 = vmax.f32 %v1392, %v1442
    %v1473 = vmax.f32 %v1394, %v1443
    %v1474 = vmax.f32 %v1398, %v1444
    %v1475 = vmax.f32 %v1400, %v1445
    %v1476 = vmax.f32 %v1402, %v1446
    %v1477 = vmax.f32 %v1404, %v1447
    %v1478 = vmax.f32 %v1408, %v1448
    %v1479 = vmax.f32 %v1410, %v1449
    %v1480 = vmax.f32 %v1412, %v1450
    %v1481 = vmax.f32 %v1414, %v1451
    %v1482 = vmax.f32 %v1418, %v1452
    %v1483 = vmax.f32 %v1420, %v1453
    %v1484 = vpack.c.bf16 %v1456, %v1454
    %v1485 = vpack.c.bf16 %v1457, %v1455
    %v1486 = vpack.c.bf16 %v1460, %v1458
    %v1487 = vpack.c.bf16 %v1461, %v1459
    %v1488 = vpack.c.bf16 %v1464, %v1462
    %v1489 = vpack.c.bf16 %v1465, %v1463
    %v1490 = vpack.c.bf16 %v1468, %v1466
    %v1491 = vpack.c.bf16 %v1469, %v1467
    %v1492 = vpack.c.bf16 %v1472, %v1470
    %v1493 = vpack.c.bf16 %v1473, %v1471
    %v1494 = vpack.c.bf16 %v1476, %v1474
    %v1495 = vpack.c.bf16 %v1477, %v1475
    %v1496 = vpack.c.bf16 %v1480, %v1478
    %v1497 = vpack.c.bf16 %v1481, %v1479
    %v1498 = vpack.c.bf16 %v1482, %v1482
    %v1499 = vpack.c.bf16 %v1483, %v1483
    %1500 = vmatprep.subr.bf16.mxu0 0
    %1501 = vmatpush1.bf16.msra.mxu0 %v617
    %1502 = vmatprep.subr.bf16.mxu0 0
    %1503 = vmatpush1.bf16.msra.mxu0 %v618
    %1504 = vmatprep.subr.bf16.mxu0 0
    %1505 = vmatpush1.bf16.msra.mxu0 %v619
    %1506 = vmatprep.subr.bf16.mxu0 0
    %1507 = vmatpush1.bf16.msra.mxu0 %v620
    %1508 = vmatprep.subr.bf16.mxu0 0
    %1509 = vmatpush1.bf16.msra.mxu0 %v621
    %1510 = vmatprep.subr.bf16.mxu0 0
    %1511 = vmatpush1.bf16.msra.mxu0 %v622
    %1512 = vmatprep.subr.bf16.mxu0 0
    %1513 = vmatpush1.bf16.msra.mxu0 %v623
    %1514 = vmatprep.subr.bf16.mxu0 0
    %1515 = vmatpush1.bf16.msra.mxu0 %v624
    %1516 = vmatprep.subr.bf16.mxu0 0
    %1517 = vmatpush1.bf16.msra.mxu0 %v625
    %1518 = vmatprep.subr.bf16.mxu0 0
    %1519 = vmatpush1.bf16.msra.mxu0 %v626
    %1520 = vmatprep.subr.bf16.mxu0 0
    %1521 = vmatpush1.bf16.msra.mxu0 %v627
    %1522 = vmatprep.subr.bf16.mxu0 0
    %1523 = vmatpush1.bf16.msra.mxu0 %v628
    %1524 = vmatprep.subr.bf16.mxu0 0
    %1525 = vmatpush1.bf16.msra.mxu0 %v629
    %1526 = vmatprep.subr.bf16.mxu0 0
    %1527 = vmatpush1.bf16.msra.mxu0 %v630
    %1528 = vmatprep.subr.bf16.mxu0 0
    %1529 = vmatpush1.bf16.msra.mxu0 %v631
    %1530 = vmatprep.subr.bf16.mxu0 0
    %1531 = vmatpush1.bf16.msra.mxu0 %v632
    %1532 = vmatprep.mubr.bf16.mxu0 %v1485
    %1533 = vmatmul.mubr.bf16.gmra.mrb[0].mxu0 %v1484
    %v1534 = vpop.f32.mrb[0].mxu0
    %v1535 = vadd.f32 %v552, %v1534
    %v1536 = vpop.f32.mrb[0].mxu0
    %v1537 = vpop.f32.mrb[0].mxu0
    %v1538 = vadd.f32 %v552, %v1537
    %v1539 = vpop.f32.mrb[0].mxu0
    %1540 = vmatprep.mubr.bf16.mxu0 %v1487
    %1541 = vmatmul.mubr.bf16.gmra.mrb[0].mxu0 %v1486
    %v1542 = vpop.f32.mrb[0].mxu0
    %v1543 = vadd.f32 %v552, %v1542
    %v1544 = vpop.f32.mrb[0].mxu0
    %v1545 = vpop.f32.mrb[0].mxu0
    %v1546 = vadd.f32 %v552, %v1545
    %v1547 = vpop.f32.mrb[0].mxu0
    %1548 = vmatprep.mubr.bf16.mxu0 %v1489
    %1549 = vmatmul.mubr.bf16.gmra.mrb[0].mxu0 %v1488
    %v1550 = vpop.f32.mrb[0].mxu0
    %v1551 = vadd.f32 %v552, %v1550
    %v1552 = vpop.f32.mrb[0].mxu0
    %v1553 = vpop.f32.mrb[0].mxu0
    %v1554 = vadd.f32 %v552, %v1553
    %v1555 = vpop.f32.mrb[0].mxu0
    %1556 = vmatprep.mubr.bf16.mxu0 %v1491
    %1557 = vmatmul.mubr.bf16.gmra.mrb[0].mxu0 %v1490
    %v1558 = vpop.f32.mrb[0].mxu0
    %v1559 = vadd.f32 %v552, %v1558
    %v1560 = vpop.f32.mrb[0].mxu0
    %v1561 = vpop.f32.mrb[0].mxu0
    %v1562 = vadd.f32 %v552, %v1561
    %v1563 = vpop.f32.mrb[0].mxu0
    %1564 = vmatprep.mubr.bf16.mxu0 %v1493
    %1565 = vmatmul.mubr.bf16.gmra.mrb[0].mxu0 %v1492
    %v1566 = vpop.f32.mrb[0].mxu0
    %v1567 = vadd.f32 %v552, %v1566
    %v1568 = vpop.f32.mrb[0].mxu0
    %v1569 = vpop.f32.mrb[0].mxu0
    %v1570 = vadd.f32 %v552, %v1569
    %v1571 = vpop.f32.mrb[0].mxu0
    %1572 = vmatprep.mubr.bf16.mxu0 %v1495
    %1573 = vmatmul.mubr.bf16.gmra.mrb[0].mxu0 %v1494
    %v1574 = vpop.f32.mrb[0].mxu0
    %v1575 = vadd.f32 %v552, %v1574
    %v1576 = vpop.f32.mrb[0].mxu0
    %v1577 = vpop.f32.mrb[0].mxu0
    %v1578 = vadd.f32 %v552, %v1577
    %v1579 = vpop.f32.mrb[0].mxu0
    %1580 = vmatprep.mubr.bf16.mxu0 %v1497
    %1581 = vmatmul.mubr.bf16.gmra.mrb[0].mxu0 %v1496
    %v1582 = vpop.f32.mrb[0].mxu0
    %v1583 = vadd.f32 %v552, %v1582
    %v1584 = vpop.f32.mrb[0].mxu0
    %v1585 = vpop.f32.mrb[0].mxu0
    %v1586 = vadd.f32 %v552, %v1585
    %v1587 = vpop.f32.mrb[0].mxu0
    %1588 = vmatprep.mubr.bf16.mxu0 %v1499
    %1589 = vmatmul.mubr.bf16.gmra.mrb[0].mxu0 %v1498
    %v1590 = vpop.f32.mrb[0].mxu0
    %v1591 = vadd.f32 %v552, %v1590
    %v1592 = vpop.f32.mrb[0].mxu0
    %v1593 = vpop.f32.mrb[0].mxu0
    %v1594 = vpop.f32.mrb[0].mxu0
    %1595 = vdwg.mxu0
    %v1596 = vmul.f32 %v1535, 0.2
    %v1597 = vmul.f32 %v1538, 0.2
    %v1598 = vmul.f32 %v1543, 0.2
    %v1599 = vmul.f32 %v1546, 0.2
    %v1600 = vmul.f32 %v1551, 0.2
    %v1601 = vmul.f32 %v1554, 0.2
    %v1602 = vmul.f32 %v1559, 0.2
    %v1603 = vmul.f32 %v1562, 0.2
    %v1604 = vmul.f32 %v1567, 0.2
    %v1605 = vmul.f32 %v1570, 0.2
    %v1606 = vmul.f32 %v1575, 0.2
    %v1607 = vmul.f32 %v1578, 0.2
    %v1608 = vmul.f32 %v1583, 0.2
    %v1609 = vmul.f32 %v1586, 0.2
    %v1610 = vmul.f32 %v1591, 0.2
    %v1611 = vmax.f32 %v1535, %v1596
    %v1612 = vmax.f32 %v1538, %v1597
    %v1613 = vmax.f32 %v1543, %v1598
    %v1614 = vmax.f32 %v1546, %v1599
    %v1615 = vmax.f32 %v1551, %v1600
    %v1616 = vmax.f32 %v1554, %v1601
    %v1617 = vmax.f32 %v1559, %v1602
    %v1618 = vmax.f32 %v1562, %v1603
    %v1619 = vmax.f32 %v1567, %v1604
    %v1620 = vmax.f32 %v1570, %v1605
    %v1621 = vmax.f32 %v1575, %v1606
    %v1622 = vmax.f32 %v1578, %v1607
    %v1623 = vmax.f32 %v1583, %v1608
    %v1624 = vmax.f32 %v1586, %v1609
    %v1625 = vmax.f32 %v1591, %v1610
    %s1626 = sld [smem:[#allocation2 + $0x11]]
    %v1627 = vstv %s1626
    %v1628 = vmul.f32 %v1611, %v1627
    %s1629 = sld [smem:[#allocation2 + $0x12]]
    %v1630 = vstv %s1629
    %v1631 = vmul.f32 %v1612, %v1630
    %s1632 = sld [smem:[#allocation2 + $0x13]]
    %v1633 = vstv %s1632
    %v1634 = vmul.f32 %v1613, %v1633
    %s1635 = sld [smem:[#allocation2 + $0x14]]
    %v1636 = vstv %s1635
    %v1637 = vmul.f32 %v1614, %v1636
    %s1638 = sld [smem:[#allocation2 + $0x15]]
    %v1639 = vstv %s1638
    %v1640 = vmul.f32 %v1615, %v1639
    %s1641 = sld [smem:[#allocation2 + $0x16]]
    %v1642 = vstv %s1641
    %v1643 = vmul.f32 %v1616, %v1642
    %s1644 = sld [smem:[#allocation2 + $0x17]]
    %v1645 = vstv %s1644
    %v1646 = vmul.f32 %v1617, %v1645
    %s1647 = sld [smem:[#allocation2 + $0x18]]
    %v1648 = vstv %s1647
    %v1649 = vmul.f32 %v1618, %v1648
    %s1650 = sld [smem:[#allocation2 + $0x19]]
    %v1651 = vstv %s1650
    %v1652 = vmul.f32 %v1619, %v1651
    %s1653 = sld [smem:[#allocation2 + $0x1a]]
    %v1654 = vstv %s1653
    %v1655 = vmul.f32 %v1620, %v1654
    %s1656 = sld [smem:[#allocation2 + $0x1b]]
    %v1657 = vstv %s1656
    %v1658 = vmul.f32 %v1621, %v1657
    %s1659 = sld [smem:[#allocation2 + $0x1c]]
    %v1660 = vstv %s1659
    %v1661 = vmul.f32 %v1622, %v1660
    %s1662 = sld [smem:[#allocation2 + $0x1d]]
    %v1663 = vstv %s1662
    %v1664 = vmul.f32 %v1623, %v1663
    %s1665 = sld [smem:[#allocation2 + $0x1e]]
    %v1666 = vstv %s1665
    %v1667 = vmul.f32 %v1624, %v1666
    %s1668 = sld [smem:[#allocation2 + $0x1f]]
    %v1669 = vstv %s1668
    %v1670 = vmul.f32 %v1625, %v1669
    %v1671 = vadd.f32 %v1628, %v1631
    %v1672 = vadd.f32 %v1634, %v1637
    %v1673 = vadd.f32 %v1640, %v1643
    %v1674 = vadd.f32 %v1646, %v1649
    %v1675 = vadd.f32 %v1652, %v1655
    %v1676 = vadd.f32 %v1658, %v1661
    %v1677 = vadd.f32 %v1664, %v1667
    %v1678 = vadd.f32 %v1671, %v1672
    %v1679 = vadd.f32 %v1673, %v1674
    %v1680 = vadd.f32 %v1675, %v1676
    %v1681 = vadd.f32 %v1677, %v1670
    %v1682 = vadd.f32 %v1678, %v1679
    %v1683 = vadd.f32 %v1680, %v1681
    %v1684 = vadd.f32 %v1682, %v1683
    %v1685 = vadd.f32 %v1029, %v1684
    %v1686 = vlaneseq
    %v1687 = vshrl.u32 %v1686, 7
    %v1688 = vsub.s32 0, %v1687
    %v1689 = vrot.slane %v44, %v1688
    %v1690 = vmul.f32 %v1685, %v1689
    %1691 = vadd.xlane.f32.xlu0 %v1690
    %v1692 = vpop.xlane.xlu0 %1691
    %vm1693 = vcmask 7168
    %1694 = vst.msk [vmem:[%s8] sm:$0xff] %vm1693, %v1692
    // Predicated region
    $region38: #{gan_discriminator_forward.1} parent=1 // pred_check
      _
    $region39: #{gan_discriminator_forward.1} parent=1 // pred_check_branch
      %1696 = sbr.rel (0) target = $region41
    $region40: #{gan_discriminator_forward.1} parent=1 // pred_region
      _
    $region41: #{gan_discriminator_forward.1} parent=1 // pred_fallthru
      _
    // Predicated region
    $region42: #{gan_discriminator_forward.1} parent=1 // pred_check
      _
    $region43: #{gan_discriminator_forward.1} parent=1 // pred_check_branch
      %1698 = sbr.rel (0) target = $region45
    $region44: #{gan_discriminator_forward.1} parent=1 // pred_region
      _
    $region45: #{gan_discriminator_forward.1} parent=1 // pred_fallthru
      _
    %1699 = vsyncpa [#allocation3], 1

</llo_original>
